<compile_context>
chip_gen: v6e
topology: v6e:2x2x1
jax: 0.10.0
libtpu: 0.0.40
codegen_flags: <defaults>
</compile_context>

<pallas_src>
import functools

import jax
import jax.numpy as jnp
from jax import lax
from jax.experimental import pallas as pl
from jax.experimental.pallas import tpu as pltpu
import numpy as np

DILATIONS = (1, 2, 4, 1)   # layerNumber = 4
NUM_LAYERS = len(DILATIONS)
NUM_BLOCKS = 3             # blockNumber = 3 (weights shared across blocks)
NUM_TAGS = 5               # len(tagDict) == len([1,1,3,3,3])
T_PAD = 128                # lane-dense output store (slice back to NUM_TAGS outside)


def idcnn_kernel(emb_ref, w1_ref, b1_ref, convw_ref, convb_ref, w2_ref, b2_ref,
                 out_ref, *, seq_len):
  """Single grid step; the batch dim is folded into the matmul M dimension.

  emb_ref:   (M, E)   with M = B*S (flattened in the wrapper), f32
  w1_ref:    (E, H)   linear1 weight (in, out), f32
  b1_ref:    (1, H)   f32
  convw_ref: (NUM_LAYERS, 3*H, H)  bf16, per-layer conv weight, taps stacked on
                                   the contraction dim: rows [0:H]=tap0
                                   (x[l-d]), [H:2H]=tap1 (x[l]), [2H:3H]=tap2
                                   (x[l+d])
  convb_ref: (NUM_LAYERS, 1, H)    f32
  w2_ref:    (H, T_PAD)  linear2 weight, tag dim zero-padded to 128, f32
  b2_ref:    (1, T_PAD)  f32
  out_ref:   (M, T_PAD)  lane-dense logits, f32
  """
  x = emb_ref[...]                      # (M, E)
  M = x.shape[0]
  H = w1_ref.shape[1]
  S = seq_len

  # ---- hoisted once (reused by all 3 blocks x 4 layers) ----
  # Pre-broadcast biases to (M, H): JAX does not CSE broadcast_in_dim.
  convb_full = [jnp.broadcast_to(convb_ref[li], (M, H))
                for li in range(NUM_LAYERS)]
  row = lax.broadcasted_iota(jnp.int32, (M, H), 0)
  pos = row % S                         # position within each length-S sequence
  # Boundary-validity masks for the dilated shifts; |d| in {1, 2, 4}.
  # They also zero the rows where the flat roll would wrap across a batch
  # (or whole-array) boundary, so rolling the flat (M, H) array is exact.
  keep = {d: (pos >= d, pos < S - d) for d in sorted(set(DILATIONS))}

  def shift_lo(v, d):
    # out[l] = v[l-d] within each sequence, zero outside ("same" padding).
    return jnp.where(keep[d][0], pltpu.roll(v, d, axis=0), 0.0)

  def shift_hi(v, d):
    # out[l] = v[l+d] within each sequence, zero outside.
    return jnp.where(keep[d][1], pltpu.roll(v, (M - d) % M, axis=0), 0.0)

  def conv_same(v, layer, d):
    # PyTorch Conv1d (cross-correlation), kernel=3, dilation=d, padding=d:
    #   y[l] = b + Wk0 @ v[l-d] + Wk1 @ v[l] + Wk2 @ v[l+d]
    # All three taps fused into one bf16 (M, 3H) @ (3H, H) MXU matmul.
    xcat = jnp.concatenate([shift_lo(v, d), v, shift_hi(v, d)], axis=-1)
    y = jnp.dot(xcat.astype(jnp.bfloat16), convw_ref[layer],
                preferred_element_type=jnp.float32)
    return y + convb_full[layer]

  def net(v):
    # Sequential order: layer0, relu, layer1, layer2, layer3 (single ReLU).
    for li, d in enumerate(DILATIONS):
      v = conv_same(v, li, d)
      if li == 0:
        v = jnp.maximum(v, 0.0)
    return v

  # linear1 (kept f32: K=768 is the accuracy-sensitive contraction)
  h = jnp.dot(x, w1_ref[...], preferred_element_type=jnp.float32) + b1_ref[...]

  # idcnn = block0(net) -> dropout(identity) -> block1(net) -> block2(net)
  for _ in range(NUM_BLOCKS):
    h = net(h)

  # linear2 into a lane-dense (M, 128) slab (columns NUM_TAGS..127 are zero).
  logits = jnp.dot(h, w2_ref[...], preferred_element_type=jnp.float32) + b2_ref[...]
  out_ref[...] = logits.astype(out_ref.dtype)


@jax.jit
def idcnn_logits_pallas(emb, w1, b1, convw_flat, convb, w2, b2):
  B, S, E = emb.shape
  H = w1.shape[1]
  T = w2.shape[1]
  M = B * S

  # Fuse the 3 conv taps on the contraction dim and pre-cast to bf16:
  # (L*3, H, H) -> (L, 3H, H) bf16 (single-pass MXU matmuls in-kernel).
  convw_cat = convw_flat.reshape(NUM_LAYERS, 3 * H, H).astype(jnp.bfloat16)
  # Lane-dense output path: zero-pad tag dim to a full 128-lane vreg.
  w2p = jnp.pad(w2, ((0, 0), (0, T_PAD - T)))
  b2p = jnp.pad(b2, ((0, 0), (0, T_PAD - T)))
  # Fold batch into the matmul M dimension (bitcast-level reshape in XLA).
  emb2d = emb.reshape(M, E)

  kernel = functools.partial(idcnn_kernel, seq_len=S)

  out = pl.pallas_call(
      kernel,
      out_shape=jax.ShapeDtypeStruct((M, T_PAD), jnp.float32),
      grid=(1,),
      in_specs=[
          pl.BlockSpec((M, E), lambda i: (0, 0)),
          pl.BlockSpec((E, H), lambda i: (0, 0)),
          pl.BlockSpec((1, H), lambda i: (0, 0)),
          pl.BlockSpec((NUM_LAYERS, 3 * H, H), lambda i: (0, 0, 0)),
          pl.BlockSpec((NUM_LAYERS, 1, H), lambda i: (0, 0, 0)),
          pl.BlockSpec((H, T_PAD), lambda i: (0, 0)),
          pl.BlockSpec((1, T_PAD), lambda i: (0, 0)),
      ],
      out_specs=pl.BlockSpec((M, T_PAD), lambda i: (0, 0)),
      compiler_params=pltpu.CompilerParams(
          dimension_semantics=("arbitrary",)),
  )(emb2d, w1, b1, convw_cat, convb, w2p, b2p)
  return out.reshape(B, S, T_PAD)[:, :, :T]


def weighted_masked_ce(logits, tags, class_weight):
  """nn.CrossEntropyLoss(weight=w) over positions where tag != 0."""
  B, S, T = logits.shape
  lf = logits.reshape(-1, T)
  tf = tags.reshape(-1)
  logp = jax.nn.log_softmax(lf, axis=-1)
  nll = -jnp.take_along_axis(logp, tf[:, None], axis=-1)[:, 0]
  wi = class_weight[tf]
  active = (tf != 0).astype(jnp.float32)
  return jnp.sum(active * wi * nll) / jnp.sum(active * wi)


def ref_logits_jax(emb, w1, b1, convw_flat, convb, w2, b2,
                   conv_dtype=jnp.float32):
  """Plain-JAX reference using lax.conv_general_dilated (NCL, like PyTorch).

  conv_dtype=jnp.bfloat16 applies the same operand rounding the kernel uses
  for its conv matmuls (accumulation stays f32), so the kernel can be checked
  tightly against an independent conv codepath.
  """
  H = w1.shape[1]
  h = emb @ w1 + b1                              # (B, S, H)
  x = jnp.transpose(h, (0, 2, 1))                # (B, H, S)   NCL
  convw = convw_flat.reshape(NUM_LAYERS, 3, H, H)      # (layer, k, in, out)
  w_oik = jnp.transpose(convw, (0, 3, 2, 1)).astype(conv_dtype)  # (layer, out, in, k)

  def net(x):
    for li, d in enumerate(DILATIONS):
      y = lax.conv_general_dilated(
          x.astype(conv_dtype), w_oik[li], window_strides=(1,),
          padding=[(d, d)], rhs_dilation=(d,),
          dimension_numbers=("NCH", "OIH", "NCH"),
          preferred_element_type=jnp.float32)
      x = y + convb[li].reshape(-1)[None, :, None]
      if li == 0:
        x = jnp.maximum(x, 0.0)
    return x

  for _ in range(NUM_BLOCKS):
    x = net(x)
  h2 = jnp.transpose(x, (0, 2, 1))               # (B, S, H)
  return h2 @ w2 + b2


if __name__ == "__main__":
  B, S, E, H, T = 2, 16, 768, 32, NUM_TAGS

  key = jax.random.PRNGKey(0)
  keys = jax.random.split(key, 10)

  emb = jax.random.normal(keys[0], (B, S, E), dtype=jnp.float32)
  tags = jax.random.randint(keys[1], (B, S), 0, T, dtype=jnp.int32)

  # Deterministic parameter init (uniform +-1/sqrt(fan_in), PyTorch-style).
  def u(k, shape, fan_in):
    lim = 1.0 / np.sqrt(fan_in)
    return jax.random.uniform(k, shape, jnp.float32, -lim, lim)

  w1 = u(keys[2], (E, H), E)
  b1 = u(keys[3], (1, H), E)
  convw_flat = u(keys[4], (NUM_LAYERS * 3, H, H), H * 3)   # (layer*3+tap, in, out)
  convb = u(keys[5], (NUM_LAYERS, 1, H), H * 3)
  w2 = u(keys[6], (H, T), H)
  b2 = u(keys[7], (1, T), H)
  class_weight = jnp.array([1.0, 1.0, 3.0, 3.0, 3.0], dtype=jnp.float32)

  logits = jax.block_until_ready(
      idcnn_logits_pallas(emb, w1, b1, convw_flat, convb, w2, b2))

  # Tight correctness check: plain-JAX reference with identically bf16-rounded
  # conv operands (independent conv codepath: lax.conv_general_dilated).
  logits_ref = jax.block_until_ready(
      ref_logits_jax(emb, w1, b1, convw_flat, convb, w2, b2,
                     conv_dtype=jnp.bfloat16))
  np.testing.assert_allclose(np.asarray(logits), np.asarray(logits_ref),
                             rtol=2e-3, atol=2e-3)

  # Loose sanity bound against the all-f32 reference (caps bf16 matmul drift).
  logits_ref_f32 = jax.block_until_ready(
      ref_logits_jax(emb, w1, b1, convw_flat, convb, w2, b2))
  np.testing.assert_allclose(np.asarray(logits), np.asarray(logits_ref_f32),
                             rtol=2e-2, atol=2e-2)

  # Loss head (masked, class-weighted cross entropy) -- small glue reduction.
  loss = jax.block_until_ready(weighted_masked_ce(logits, tags, class_weight))
  loss_ref = weighted_masked_ce(logits_ref, tags, class_weight)
  np.testing.assert_allclose(float(loss), float(loss_ref), rtol=1e-3, atol=1e-3)

  print("KERNEL_OK")
</pallas_src>

<mosaic_0001>
module attributes {stable_mosaic.version = 11 : i64} {
  func.func @idcnn_kernel(%arg0: i32, %arg1: memref<32x768xf32, #tpu.memory_space<vmem>>, %arg2: memref<768x32xf32, #tpu.memory_space<vmem>>, %arg3: memref<1x32xf32, #tpu.memory_space<vmem>>, %arg4: memref<4x96x32xbf16, #tpu.memory_space<vmem>>, %arg5: memref<4x1x32xf32, #tpu.memory_space<vmem>>, %arg6: memref<32x128xf32, #tpu.memory_space<vmem>>, %arg7: memref<1x128xf32, #tpu.memory_space<vmem>>, %arg8: memref<32x128xf32, #tpu.memory_space<vmem>>) attributes {dimension_semantics = [#tpu.dimension_semantics<arbitrary>], iteration_bounds = array<i64: 1>, scalar_prefetch = 0 : i64, scratch_operands = 0 : i64, tpu.core_type = #tpu.core_type<tc>, window_params = [{pipeline_mode = #tpu.pipeline_mode<synchronous>, transform_indices = @transform_0, window_bounds = array<i64: 32, 768>}, {pipeline_mode = #tpu.pipeline_mode<synchronous>, transform_indices = @transform_1, window_bounds = array<i64: 768, 32>}, {pipeline_mode = #tpu.pipeline_mode<synchronous>, transform_indices = @transform_2, window_bounds = array<i64: 1, 32>}, {pipeline_mode = #tpu.pipeline_mode<synchronous>, transform_indices = @transform_3, window_bounds = array<i64: 4, 96, 32>}, {pipeline_mode = #tpu.pipeline_mode<synchronous>, transform_indices = @transform_4, window_bounds = array<i64: 4, 1, 32>}, {pipeline_mode = #tpu.pipeline_mode<synchronous>, transform_indices = @transform_5, window_bounds = array<i64: 32, 128>}, {pipeline_mode = #tpu.pipeline_mode<synchronous>, transform_indices = @transform_6, window_bounds = array<i64: 1, 128>}, {pipeline_mode = #tpu.pipeline_mode<synchronous>, transform_indices = @transform_7, window_bounds = array<i64: 32, 128>}]} {
    %c0 = arith.constant 0 : index
    %c0_0 = arith.constant 0 : index
    %0 = vector.load %arg1[%c0, %c0_0] : memref<32x768xf32, #tpu.memory_space<vmem>>, vector<32x768xf32>
    %c0_1 = arith.constant 0 : index
    %c0_2 = arith.constant 0 : index
    %c0_3 = arith.constant 0 : index
    %1 = vector.load %arg5[%c0_1, %c0_2, %c0_3] : memref<4x1x32xf32, #tpu.memory_space<vmem>>, vector<1x1x32xf32>
    %2 = vector.shape_cast %1 : vector<1x1x32xf32> to vector<1x32xf32>
    %3 = vector.shape_cast %2 : vector<1x32xf32> to vector<1x32xf32>
    %4 = vector.broadcast %3 : vector<1x32xf32> to vector<32x32xf32>
    %c1 = arith.constant 1 : index
    %c0_4 = arith.constant 0 : index
    %c0_5 = arith.constant 0 : index
    %5 = vector.load %arg5[%c1, %c0_4, %c0_5] : memref<4x1x32xf32, #tpu.memory_space<vmem>>, vector<1x1x32xf32>
    %6 = vector.shape_cast %5 : vector<1x1x32xf32> to vector<1x32xf32>
    %7 = vector.shape_cast %6 : vector<1x32xf32> to vector<1x32xf32>
    %8 = vector.broadcast %7 : vector<1x32xf32> to vector<32x32xf32>
    %c2 = arith.constant 2 : index
    %c0_6 = arith.constant 0 : index
    %c0_7 = arith.constant 0 : index
    %9 = vector.load %arg5[%c2, %c0_6, %c0_7] : memref<4x1x32xf32, #tpu.memory_space<vmem>>, vector<1x1x32xf32>
    %10 = vector.shape_cast %9 : vector<1x1x32xf32> to vector<1x32xf32>
    %11 = vector.shape_cast %10 : vector<1x32xf32> to vector<1x32xf32>
    %12 = vector.broadcast %11 : vector<1x32xf32> to vector<32x32xf32>
    %c3 = arith.constant 3 : index
    %c0_8 = arith.constant 0 : index
    %c0_9 = arith.constant 0 : index
    %13 = vector.load %arg5[%c3, %c0_8, %c0_9] : memref<4x1x32xf32, #tpu.memory_space<vmem>>, vector<1x1x32xf32>
    %14 = vector.shape_cast %13 : vector<1x1x32xf32> to vector<1x32xf32>
    %15 = vector.shape_cast %14 : vector<1x32xf32> to vector<1x32xf32>
    %16 = vector.broadcast %15 : vector<1x32xf32> to vector<32x32xf32>
    %17 = tpu.iota {dimensions = array<i32: 0>} : vector<32x32xi32>
    %c16_i32 = arith.constant 16 : i32
    %c0_i32 = arith.constant 0 : i32
    %18 = arith.cmpi eq, %c16_i32, %c0_i32 : i32
    %c1_i32 = arith.constant 1 : i32
    %19 = arith.select %18, %c1_i32, %c16_i32 : i32
    %20 = vector.broadcast %19 : i32 to vector<32x32xi32>
    %21 = arith.remsi %17, %20 : vector<32x32xi32>
    %c0_i32_10 = arith.constant 0 : i32
    %22 = vector.broadcast %c0_i32_10 : i32 to vector<32x32xi32>
    %23 = arith.cmpi ne, %21, %22 : vector<32x32xi32>
    %c0_i32_11 = arith.constant 0 : i32
    %24 = vector.broadcast %c0_i32_11 : i32 to vector<32x32xi32>
    %25 = arith.cmpi slt, %21, %24 : vector<32x32xi32>
    %c0_i32_12 = arith.constant 0 : i32
    %26 = arith.cmpi slt, %19, %c0_i32_12 : i32
    %27 = vector.broadcast %26 : i1 to vector<32x32xi1>
    %28 = vector.broadcast %27 : vector<32x32xi1> to vector<32x32xi1>
    %29 = arith.xori %25, %28 : vector<32x32xi1>
    %30 = arith.andi %29, %23 : vector<32x32xi1>
    %31 = vector.broadcast %19 : i32 to vector<32x32xi32>
    %32 = arith.addi %21, %31 : vector<32x32xi32>
    %33 = arith.select %30, %32, %21 : vector<32x32xi1>, vector<32x32xi32>
    %c1_i32_13 = arith.constant 1 : i32
    %34 = vector.broadcast %c1_i32_13 : i32 to vector<32x32xi32>
    %35 = arith.cmpi sge, %33, %34 : vector<32x32xi32>
    %c15_i32 = arith.constant 15 : i32
    %36 = vector.broadcast %c15_i32 : i32 to vector<32x32xi32>
    %37 = arith.cmpi slt, %33, %36 : vector<32x32xi32>
    %c2_i32 = arith.constant 2 : i32
    %38 = vector.broadcast %c2_i32 : i32 to vector<32x32xi32>
    %39 = arith.cmpi sge, %33, %38 : vector<32x32xi32>
    %c14_i32 = arith.constant 14 : i32
    %40 = vector.broadcast %c14_i32 : i32 to vector<32x32xi32>
    %41 = arith.cmpi slt, %33, %40 : vector<32x32xi32>
    %c4_i32 = arith.constant 4 : i32
    %42 = vector.broadcast %c4_i32 : i32 to vector<32x32xi32>
    %43 = arith.cmpi sge, %33, %42 : vector<32x32xi32>
    %c12_i32 = arith.constant 12 : i32
    %44 = vector.broadcast %c12_i32 : i32 to vector<32x32xi32>
    %45 = arith.cmpi slt, %33, %44 : vector<32x32xi32>
    %c0_14 = arith.constant 0 : index
    %c0_15 = arith.constant 0 : index
    %46 = vector.load %arg2[%c0_14, %c0_15] : memref<768x32xf32, #tpu.memory_space<vmem>>, vector<768x32xf32>
    %cst = arith.constant dense<0.000000e+00> : vector<32x32xf32>
    %47 = tpu.matmul %0, %46, %cst {dimension_numbers = #tpu.dot_dimension_numbers<[1], [0], [0], [1], [0, 0, 1, 1], [], []>} : vector<32x768xf32>, vector<768x32xf32>, vector<32x32xf32> -> vector<32x32xf32>
    %c0_16 = arith.constant 0 : index
    %c0_17 = arith.constant 0 : index
    %48 = vector.load %arg3[%c0_16, %c0_17] : memref<1x32xf32, #tpu.memory_space<vmem>>, vector<1x32xf32>
    %49 = vector.broadcast %48 : vector<1x32xf32> to vector<32x32xf32>
    %50 = arith.addf %47, %49 : vector<32x32xf32>
    %c1_i32_18 = arith.constant 1 : i32
    %51 = tpu.dynamic_rotate %50 by %c1_i32_18 dim 0 : vector<32x32xf32>, i32 -> vector<32x32xf32>
    %cst_19 = arith.constant 0.000000e+00 : f32
    %52 = vector.broadcast %cst_19 : f32 to vector<32x32xf32>
    %53 = arith.select %35, %51, %52 : vector<32x32xi1>, vector<32x32xf32>
    %c31_i32 = arith.constant 31 : i32
    %54 = tpu.dynamic_rotate %50 by %c31_i32 dim 0 : vector<32x32xf32>, i32 -> vector<32x32xf32>
    %cst_20 = arith.constant 0.000000e+00 : f32
    %55 = vector.broadcast %cst_20 : f32 to vector<32x32xf32>
    %56 = arith.select %37, %54, %55 : vector<32x32xi1>, vector<32x32xf32>
    %57 = tpu.concatenate %53, %50, %56 in 1 : vector<32x32xf32>, vector<32x32xf32>, vector<32x32xf32> -> vector<32x96xf32>
    %58 = arith.truncf %57 : vector<32x96xf32> to vector<32x96xbf16>
    %c0_21 = arith.constant 0 : index
    %c0_22 = arith.constant 0 : index
    %c0_23 = arith.constant 0 : index
    %59 = vector.load %arg4[%c0_21, %c0_22, %c0_23] : memref<4x96x32xbf16, #tpu.memory_space<vmem>>, vector<1x96x32xbf16>
    %60 = vector.shape_cast %59 : vector<1x96x32xbf16> to vector<96x32xbf16>
    %cst_24 = arith.constant dense<0.000000e+00> : vector<32x32xf32>
    %61 = tpu.matmul %58, %60, %cst_24 {dimension_numbers = #tpu.dot_dimension_numbers<[1], [0], [0], [1], [0, 0, 1, 1], [], []>} : vector<32x96xbf16>, vector<96x32xbf16>, vector<32x32xf32> -> vector<32x32xf32>
    %62 = arith.addf %61, %4 : vector<32x32xf32>
    %cst_25 = arith.constant 0.000000e+00 : f32
    %63 = vector.broadcast %cst_25 : f32 to vector<32x32xf32>
    %64 = arith.maximumf %62, %63 : vector<32x32xf32>
    %c2_i32_26 = arith.constant 2 : i32
    %65 = tpu.dynamic_rotate %64 by %c2_i32_26 dim 0 : vector<32x32xf32>, i32 -> vector<32x32xf32>
    %cst_27 = arith.constant 0.000000e+00 : f32
    %66 = vector.broadcast %cst_27 : f32 to vector<32x32xf32>
    %67 = arith.select %39, %65, %66 : vector<32x32xi1>, vector<32x32xf32>
    %c30_i32 = arith.constant 30 : i32
    %68 = tpu.dynamic_rotate %64 by %c30_i32 dim 0 : vector<32x32xf32>, i32 -> vector<32x32xf32>
    %cst_28 = arith.constant 0.000000e+00 : f32
    %69 = vector.broadcast %cst_28 : f32 to vector<32x32xf32>
    %70 = arith.select %41, %68, %69 : vector<32x32xi1>, vector<32x32xf32>
    %71 = tpu.concatenate %67, %64, %70 in 1 : vector<32x32xf32>, vector<32x32xf32>, vector<32x32xf32> -> vector<32x96xf32>
    %72 = arith.truncf %71 : vector<32x96xf32> to vector<32x96xbf16>
    %c1_29 = arith.constant 1 : index
    %c0_30 = arith.constant 0 : index
    %c0_31 = arith.constant 0 : index
    %73 = vector.load %arg4[%c1_29, %c0_30, %c0_31] : memref<4x96x32xbf16, #tpu.memory_space<vmem>>, vector<1x96x32xbf16>
    %74 = vector.shape_cast %73 : vector<1x96x32xbf16> to vector<96x32xbf16>
    %cst_32 = arith.constant dense<0.000000e+00> : vector<32x32xf32>
    %75 = tpu.matmul %72, %74, %cst_32 {dimension_numbers = #tpu.dot_dimension_numbers<[1], [0], [0], [1], [0, 0, 1, 1], [], []>} : vector<32x96xbf16>, vector<96x32xbf16>, vector<32x32xf32> -> vector<32x32xf32>
    %76 = arith.addf %75, %8 : vector<32x32xf32>
    %c4_i32_33 = arith.constant 4 : i32
    %77 = tpu.dynamic_rotate %76 by %c4_i32_33 dim 0 : vector<32x32xf32>, i32 -> vector<32x32xf32>
    %cst_34 = arith.constant 0.000000e+00 : f32
    %78 = vector.broadcast %cst_34 : f32 to vector<32x32xf32>
    %79 = arith.select %43, %77, %78 : vector<32x32xi1>, vector<32x32xf32>
    %c28_i32 = arith.constant 28 : i32
    %80 = tpu.dynamic_rotate %76 by %c28_i32 dim 0 : vector<32x32xf32>, i32 -> vector<32x32xf32>
    %cst_35 = arith.constant 0.000000e+00 : f32
    %81 = vector.broadcast %cst_35 : f32 to vector<32x32xf32>
    %82 = arith.select %45, %80, %81 : vector<32x32xi1>, vector<32x32xf32>
    %83 = tpu.concatenate %79, %76, %82 in 1 : vector<32x32xf32>, vector<32x32xf32>, vector<32x32xf32> -> vector<32x96xf32>
    %84 = arith.truncf %83 : vector<32x96xf32> to vector<32x96xbf16>
    %c2_36 = arith.constant 2 : index
    %c0_37 = arith.constant 0 : index
    %c0_38 = arith.constant 0 : index
    %85 = vector.load %arg4[%c2_36, %c0_37, %c0_38] : memref<4x96x32xbf16, #tpu.memory_space<vmem>>, vector<1x96x32xbf16>
    %86 = vector.shape_cast %85 : vector<1x96x32xbf16> to vector<96x32xbf16>
    %cst_39 = arith.constant dense<0.000000e+00> : vector<32x32xf32>
    %87 = tpu.matmul %84, %86, %cst_39 {dimension_numbers = #tpu.dot_dimension_numbers<[1], [0], [0], [1], [0, 0, 1, 1], [], []>} : vector<32x96xbf16>, vector<96x32xbf16>, vector<32x32xf32> -> vector<32x32xf32>
    %88 = arith.addf %87, %12 : vector<32x32xf32>
    %c1_i32_40 = arith.constant 1 : i32
    %89 = tpu.dynamic_rotate %88 by %c1_i32_40 dim 0 : vector<32x32xf32>, i32 -> vector<32x32xf32>
    %cst_41 = arith.constant 0.000000e+00 : f32
    %90 = vector.broadcast %cst_41 : f32 to vector<32x32xf32>
    %91 = arith.select %35, %89, %90 : vector<32x32xi1>, vector<32x32xf32>
    %c31_i32_42 = arith.constant 31 : i32
    %92 = tpu.dynamic_rotate %88 by %c31_i32_42 dim 0 : vector<32x32xf32>, i32 -> vector<32x32xf32>
    %cst_43 = arith.constant 0.000000e+00 : f32
    %93 = vector.broadcast %cst_43 : f32 to vector<32x32xf32>
    %94 = arith.select %37, %92, %93 : vector<32x32xi1>, vector<32x32xf32>
    %95 = tpu.concatenate %91, %88, %94 in 1 : vector<32x32xf32>, vector<32x32xf32>, vector<32x32xf32> -> vector<32x96xf32>
    %96 = arith.truncf %95 : vector<32x96xf32> to vector<32x96xbf16>
    %c3_44 = arith.constant 3 : index
    %c0_45 = arith.constant 0 : index
    %c0_46 = arith.constant 0 : index
    %97 = vector.load %arg4[%c3_44, %c0_45, %c0_46] : memref<4x96x32xbf16, #tpu.memory_space<vmem>>, vector<1x96x32xbf16>
    %98 = vector.shape_cast %97 : vector<1x96x32xbf16> to vector<96x32xbf16>
    %cst_47 = arith.constant dense<0.000000e+00> : vector<32x32xf32>
    %99 = tpu.matmul %96, %98, %cst_47 {dimension_numbers = #tpu.dot_dimension_numbers<[1], [0], [0], [1], [0, 0, 1, 1], [], []>} : vector<32x96xbf16>, vector<96x32xbf16>, vector<32x32xf32> -> vector<32x32xf32>
    %100 = arith.addf %99, %16 : vector<32x32xf32>
    %c1_i32_48 = arith.constant 1 : i32
    %101 = tpu.dynamic_rotate %100 by %c1_i32_48 dim 0 : vector<32x32xf32>, i32 -> vector<32x32xf32>
    %cst_49 = arith.constant 0.000000e+00 : f32
    %102 = vector.broadcast %cst_49 : f32 to vector<32x32xf32>
    %103 = arith.select %35, %101, %102 : vector<32x32xi1>, vector<32x32xf32>
    %c31_i32_50 = arith.constant 31 : i32
    %104 = tpu.dynamic_rotate %100 by %c31_i32_50 dim 0 : vector<32x32xf32>, i32 -> vector<32x32xf32>
    %cst_51 = arith.constant 0.000000e+00 : f32
    %105 = vector.broadcast %cst_51 : f32 to vector<32x32xf32>
    %106 = arith.select %37, %104, %105 : vector<32x32xi1>, vector<32x32xf32>
    %107 = tpu.concatenate %103, %100, %106 in 1 : vector<32x32xf32>, vector<32x32xf32>, vector<32x32xf32> -> vector<32x96xf32>
    %108 = arith.truncf %107 : vector<32x96xf32> to vector<32x96xbf16>
    %c0_52 = arith.constant 0 : index
    %c0_53 = arith.constant 0 : index
    %c0_54 = arith.constant 0 : index
    %109 = vector.load %arg4[%c0_52, %c0_53, %c0_54] : memref<4x96x32xbf16, #tpu.memory_space<vmem>>, vector<1x96x32xbf16>
    %110 = vector.shape_cast %109 : vector<1x96x32xbf16> to vector<96x32xbf16>
    %cst_55 = arith.constant dense<0.000000e+00> : vector<32x32xf32>
    %111 = tpu.matmul %108, %110, %cst_55 {dimension_numbers = #tpu.dot_dimension_numbers<[1], [0], [0], [1], [0, 0, 1, 1], [], []>} : vector<32x96xbf16>, vector<96x32xbf16>, vector<32x32xf32> -> vector<32x32xf32>
    %112 = arith.addf %111, %4 : vector<32x32xf32>
    %cst_56 = arith.constant 0.000000e+00 : f32
    %113 = vector.broadcast %cst_56 : f32 to vector<32x32xf32>
    %114 = arith.maximumf %112, %113 : vector<32x32xf32>
    %c2_i32_57 = arith.constant 2 : i32
    %115 = tpu.dynamic_rotate %114 by %c2_i32_57 dim 0 : vector<32x32xf32>, i32 -> vector<32x32xf32>
    %cst_58 = arith.constant 0.000000e+00 : f32
    %116 = vector.broadcast %cst_58 : f32 to vector<32x32xf32>
    %117 = arith.select %39, %115, %116 : vector<32x32xi1>, vector<32x32xf32>
    %c30_i32_59 = arith.constant 30 : i32
    %118 = tpu.dynamic_rotate %114 by %c30_i32_59 dim 0 : vector<32x32xf32>, i32 -> vector<32x32xf32>
    %cst_60 = arith.constant 0.000000e+00 : f32
    %119 = vector.broadcast %cst_60 : f32 to vector<32x32xf32>
    %120 = arith.select %41, %118, %119 : vector<32x32xi1>, vector<32x32xf32>
    %121 = tpu.concatenate %117, %114, %120 in 1 : vector<32x32xf32>, vector<32x32xf32>, vector<32x32xf32> -> vector<32x96xf32>
    %122 = arith.truncf %121 : vector<32x96xf32> to vector<32x96xbf16>
    %c1_61 = arith.constant 1 : index
    %c0_62 = arith.constant 0 : index
    %c0_63 = arith.constant 0 : index
    %123 = vector.load %arg4[%c1_61, %c0_62, %c0_63] : memref<4x96x32xbf16, #tpu.memory_space<vmem>>, vector<1x96x32xbf16>
    %124 = vector.shape_cast %123 : vector<1x96x32xbf16> to vector<96x32xbf16>
    %cst_64 = arith.constant dense<0.000000e+00> : vector<32x32xf32>
    %125 = tpu.matmul %122, %124, %cst_64 {dimension_numbers = #tpu.dot_dimension_numbers<[1], [0], [0], [1], [0, 0, 1, 1], [], []>} : vector<32x96xbf16>, vector<96x32xbf16>, vector<32x32xf32> -> vector<32x32xf32>
    %126 = arith.addf %125, %8 : vector<32x32xf32>
    %c4_i32_65 = arith.constant 4 : i32
    %127 = tpu.dynamic_rotate %126 by %c4_i32_65 dim 0 : vector<32x32xf32>, i32 -> vector<32x32xf32>
    %cst_66 = arith.constant 0.000000e+00 : f32
    %128 = vector.broadcast %cst_66 : f32 to vector<32x32xf32>
    %129 = arith.select %43, %127, %128 : vector<32x32xi1>, vector<32x32xf32>
    %c28_i32_67 = arith.constant 28 : i32
    %130 = tpu.dynamic_rotate %126 by %c28_i32_67 dim 0 : vector<32x32xf32>, i32 -> vector<32x32xf32>
    %cst_68 = arith.constant 0.000000e+00 : f32
    %131 = vector.broadcast %cst_68 : f32 to vector<32x32xf32>
    %132 = arith.select %45, %130, %131 : vector<32x32xi1>, vector<32x32xf32>
    %133 = tpu.concatenate %129, %126, %132 in 1 : vector<32x32xf32>, vector<32x32xf32>, vector<32x32xf32> -> vector<32x96xf32>
    %134 = arith.truncf %133 : vector<32x96xf32> to vector<32x96xbf16>
    %c2_69 = arith.constant 2 : index
    %c0_70 = arith.constant 0 : index
    %c0_71 = arith.constant 0 : index
    %135 = vector.load %arg4[%c2_69, %c0_70, %c0_71] : memref<4x96x32xbf16, #tpu.memory_space<vmem>>, vector<1x96x32xbf16>
    %136 = vector.shape_cast %135 : vector<1x96x32xbf16> to vector<96x32xbf16>
    %cst_72 = arith.constant dense<0.000000e+00> : vector<32x32xf32>
    %137 = tpu.matmul %134, %136, %cst_72 {dimension_numbers = #tpu.dot_dimension_numbers<[1], [0], [0], [1], [0, 0, 1, 1], [], []>} : vector<32x96xbf16>, vector<96x32xbf16>, vector<32x32xf32> -> vector<32x32xf32>
    %138 = arith.addf %137, %12 : vector<32x32xf32>
    %c1_i32_73 = arith.constant 1 : i32
    %139 = tpu.dynamic_rotate %138 by %c1_i32_73 dim 0 : vector<32x32xf32>, i32 -> vector<32x32xf32>
    %cst_74 = arith.constant 0.000000e+00 : f32
    %140 = vector.broadcast %cst_74 : f32 to vector<32x32xf32>
    %141 = arith.select %35, %139, %140 : vector<32x32xi1>, vector<32x32xf32>
    %c31_i32_75 = arith.constant 31 : i32
    %142 = tpu.dynamic_rotate %138 by %c31_i32_75 dim 0 : vector<32x32xf32>, i32 -> vector<32x32xf32>
    %cst_76 = arith.constant 0.000000e+00 : f32
    %143 = vector.broadcast %cst_76 : f32 to vector<32x32xf32>
    %144 = arith.select %37, %142, %143 : vector<32x32xi1>, vector<32x32xf32>
    %145 = tpu.concatenate %141, %138, %144 in 1 : vector<32x32xf32>, vector<32x32xf32>, vector<32x32xf32> -> vector<32x96xf32>
    %146 = arith.truncf %145 : vector<32x96xf32> to vector<32x96xbf16>
    %c3_77 = arith.constant 3 : index
    %c0_78 = arith.constant 0 : index
    %c0_79 = arith.constant 0 : index
    %147 = vector.load %arg4[%c3_77, %c0_78, %c0_79] : memref<4x96x32xbf16, #tpu.memory_space<vmem>>, vector<1x96x32xbf16>
    %148 = vector.shape_cast %147 : vector<1x96x32xbf16> to vector<96x32xbf16>
    %cst_80 = arith.constant dense<0.000000e+00> : vector<32x32xf32>
    %149 = tpu.matmul %146, %148, %cst_80 {dimension_numbers = #tpu.dot_dimension_numbers<[1], [0], [0], [1], [0, 0, 1, 1], [], []>} : vector<32x96xbf16>, vector<96x32xbf16>, vector<32x32xf32> -> vector<32x32xf32>
    %150 = arith.addf %149, %16 : vector<32x32xf32>
    %c1_i32_81 = arith.constant 1 : i32
    %151 = tpu.dynamic_rotate %150 by %c1_i32_81 dim 0 : vector<32x32xf32>, i32 -> vector<32x32xf32>
    %cst_82 = arith.constant 0.000000e+00 : f32
    %152 = vector.broadcast %cst_82 : f32 to vector<32x32xf32>
    %153 = arith.select %35, %151, %152 : vector<32x32xi1>, vector<32x32xf32>
    %c31_i32_83 = arith.constant 31 : i32
    %154 = tpu.dynamic_rotate %150 by %c31_i32_83 dim 0 : vector<32x32xf32>, i32 -> vector<32x32xf32>
    %cst_84 = arith.constant 0.000000e+00 : f32
    %155 = vector.broadcast %cst_84 : f32 to vector<32x32xf32>
    %156 = arith.select %37, %154, %155 : vector<32x32xi1>, vector<32x32xf32>
    %157 = tpu.concatenate %153, %150, %156 in 1 : vector<32x32xf32>, vector<32x32xf32>, vector<32x32xf32> -> vector<32x96xf32>
    %158 = arith.truncf %157 : vector<32x96xf32> to vector<32x96xbf16>
    %c0_85 = arith.constant 0 : index
    %c0_86 = arith.constant 0 : index
    %c0_87 = arith.constant 0 : index
    %159 = vector.load %arg4[%c0_85, %c0_86, %c0_87] : memref<4x96x32xbf16, #tpu.memory_space<vmem>>, vector<1x96x32xbf16>
    %160 = vector.shape_cast %159 : vector<1x96x32xbf16> to vector<96x32xbf16>
    %cst_88 = arith.constant dense<0.000000e+00> : vector<32x32xf32>
    %161 = tpu.matmul %158, %160, %cst_88 {dimension_numbers = #tpu.dot_dimension_numbers<[1], [0], [0], [1], [0, 0, 1, 1], [], []>} : vector<32x96xbf16>, vector<96x32xbf16>, vector<32x32xf32> -> vector<32x32xf32>
    %162 = arith.addf %161, %4 : vector<32x32xf32>
    %cst_89 = arith.constant 0.000000e+00 : f32
    %163 = vector.broadcast %cst_89 : f32 to vector<32x32xf32>
    %164 = arith.maximumf %162, %163 : vector<32x32xf32>
    %c2_i32_90 = arith.constant 2 : i32
    %165 = tpu.dynamic_rotate %164 by %c2_i32_90 dim 0 : vector<32x32xf32>, i32 -> vector<32x32xf32>
    %cst_91 = arith.constant 0.000000e+00 : f32
    %166 = vector.broadcast %cst_91 : f32 to vector<32x32xf32>
    %167 = arith.select %39, %165, %166 : vector<32x32xi1>, vector<32x32xf32>
    %c30_i32_92 = arith.constant 30 : i32
    %168 = tpu.dynamic_rotate %164 by %c30_i32_92 dim 0 : vector<32x32xf32>, i32 -> vector<32x32xf32>
    %cst_93 = arith.constant 0.000000e+00 : f32
    %169 = vector.broadcast %cst_93 : f32 to vector<32x32xf32>
    %170 = arith.select %41, %168, %169 : vector<32x32xi1>, vector<32x32xf32>
    %171 = tpu.concatenate %167, %164, %170 in 1 : vector<32x32xf32>, vector<32x32xf32>, vector<32x32xf32> -> vector<32x96xf32>
    %172 = arith.truncf %171 : vector<32x96xf32> to vector<32x96xbf16>
    %c1_94 = arith.constant 1 : index
    %c0_95 = arith.constant 0 : index
    %c0_96 = arith.constant 0 : index
    %173 = vector.load %arg4[%c1_94, %c0_95, %c0_96] : memref<4x96x32xbf16, #tpu.memory_space<vmem>>, vector<1x96x32xbf16>
    %174 = vector.shape_cast %173 : vector<1x96x32xbf16> to vector<96x32xbf16>
    %cst_97 = arith.constant dense<0.000000e+00> : vector<32x32xf32>
    %175 = tpu.matmul %172, %174, %cst_97 {dimension_numbers = #tpu.dot_dimension_numbers<[1], [0], [0], [1], [0, 0, 1, 1], [], []>} : vector<32x96xbf16>, vector<96x32xbf16>, vector<32x32xf32> -> vector<32x32xf32>
    %176 = arith.addf %175, %8 : vector<32x32xf32>
    %c4_i32_98 = arith.constant 4 : i32
    %177 = tpu.dynamic_rotate %176 by %c4_i32_98 dim 0 : vector<32x32xf32>, i32 -> vector<32x32xf32>
    %cst_99 = arith.constant 0.000000e+00 : f32
    %178 = vector.broadcast %cst_99 : f32 to vector<32x32xf32>
    %179 = arith.select %43, %177, %178 : vector<32x32xi1>, vector<32x32xf32>
    %c28_i32_100 = arith.constant 28 : i32
    %180 = tpu.dynamic_rotate %176 by %c28_i32_100 dim 0 : vector<32x32xf32>, i32 -> vector<32x32xf32>
    %cst_101 = arith.constant 0.000000e+00 : f32
    %181 = vector.broadcast %cst_101 : f32 to vector<32x32xf32>
    %182 = arith.select %45, %180, %181 : vector<32x32xi1>, vector<32x32xf32>
    %183 = tpu.concatenate %179, %176, %182 in 1 : vector<32x32xf32>, vector<32x32xf32>, vector<32x32xf32> -> vector<32x96xf32>
    %184 = arith.truncf %183 : vector<32x96xf32> to vector<32x96xbf16>
    %c2_102 = arith.constant 2 : index
    %c0_103 = arith.constant 0 : index
    %c0_104 = arith.constant 0 : index
    %185 = vector.load %arg4[%c2_102, %c0_103, %c0_104] : memref<4x96x32xbf16, #tpu.memory_space<vmem>>, vector<1x96x32xbf16>
    %186 = vector.shape_cast %185 : vector<1x96x32xbf16> to vector<96x32xbf16>
    %cst_105 = arith.constant dense<0.000000e+00> : vector<32x32xf32>
    %187 = tpu.matmul %184, %186, %cst_105 {dimension_numbers = #tpu.dot_dimension_numbers<[1], [0], [0], [1], [0, 0, 1, 1], [], []>} : vector<32x96xbf16>, vector<96x32xbf16>, vector<32x32xf32> -> vector<32x32xf32>
    %188 = arith.addf %187, %12 : vector<32x32xf32>
    %c1_i32_106 = arith.constant 1 : i32
    %189 = tpu.dynamic_rotate %188 by %c1_i32_106 dim 0 : vector<32x32xf32>, i32 -> vector<32x32xf32>
    %cst_107 = arith.constant 0.000000e+00 : f32
    %190 = vector.broadcast %cst_107 : f32 to vector<32x32xf32>
    %191 = arith.select %35, %189, %190 : vector<32x32xi1>, vector<32x32xf32>
    %c31_i32_108 = arith.constant 31 : i32
    %192 = tpu.dynamic_rotate %188 by %c31_i32_108 dim 0 : vector<32x32xf32>, i32 -> vector<32x32xf32>
    %cst_109 = arith.constant 0.000000e+00 : f32
    %193 = vector.broadcast %cst_109 : f32 to vector<32x32xf32>
    %194 = arith.select %37, %192, %193 : vector<32x32xi1>, vector<32x32xf32>
    %195 = tpu.concatenate %191, %188, %194 in 1 : vector<32x32xf32>, vector<32x32xf32>, vector<32x32xf32> -> vector<32x96xf32>
    %196 = arith.truncf %195 : vector<32x96xf32> to vector<32x96xbf16>
    %c3_110 = arith.constant 3 : index
    %c0_111 = arith.constant 0 : index
    %c0_112 = arith.constant 0 : index
    %197 = vector.load %arg4[%c3_110, %c0_111, %c0_112] : memref<4x96x32xbf16, #tpu.memory_space<vmem>>, vector<1x96x32xbf16>
    %198 = vector.shape_cast %197 : vector<1x96x32xbf16> to vector<96x32xbf16>
    %cst_113 = arith.constant dense<0.000000e+00> : vector<32x32xf32>
    %199 = tpu.matmul %196, %198, %cst_113 {dimension_numbers = #tpu.dot_dimension_numbers<[1], [0], [0], [1], [0, 0, 1, 1], [], []>} : vector<32x96xbf16>, vector<96x32xbf16>, vector<32x32xf32> -> vector<32x32xf32>
    %200 = arith.addf %199, %16 : vector<32x32xf32>
    %c0_114 = arith.constant 0 : index
    %c0_115 = arith.constant 0 : index
    %201 = vector.load %arg6[%c0_114, %c0_115] : memref<32x128xf32, #tpu.memory_space<vmem>>, vector<32x128xf32>
    %cst_116 = arith.constant dense<0.000000e+00> : vector<32x128xf32>
    %202 = tpu.matmul %200, %201, %cst_116 {dimension_numbers = #tpu.dot_dimension_numbers<[1], [0], [0], [1], [0, 0, 1, 1], [], []>} : vector<32x32xf32>, vector<32x128xf32>, vector<32x128xf32> -> vector<32x128xf32>
    %c0_117 = arith.constant 0 : index
    %c0_118 = arith.constant 0 : index
    %203 = vector.load %arg7[%c0_117, %c0_118] : memref<1x128xf32, #tpu.memory_space<vmem>>, vector<1x128xf32>
    %204 = vector.broadcast %203 : vector<1x128xf32> to vector<32x128xf32>
    %205 = arith.addf %202, %204 : vector<32x128xf32>
    %c0_119 = arith.constant 0 : index
    %c0_120 = arith.constant 0 : index
    %206 = vector.load %arg8[%c0_119, %c0_120] : memref<32x128xf32, #tpu.memory_space<vmem>>, vector<32x128xf32>
    tpu.vector_store %arg8[%c0_119, %c0_120], %205 {strides = array<i32>} : memref<32x128xf32, #tpu.memory_space<vmem>>, vector<32x128xf32>,
    return
  }
  func.func @transform_0(%arg0: i32) -> (i32, i32) {
    %c0_i32 = arith.constant 0 : i32
    %c0_i32_0 = arith.constant 0 : i32
    %c0_i32_1 = arith.constant 0 : i32
    return %c0_i32, %c0_i32_0 : i32, i32
  }
  func.func @transform_1(%arg0: i32) -> (i32, i32) {
    %c0_i32 = arith.constant 0 : i32
    %c0_i32_0 = arith.constant 0 : i32
    %c0_i32_1 = arith.constant 0 : i32
    return %c0_i32, %c0_i32_0 : i32, i32
  }
  func.func @transform_2(%arg0: i32) -> (i32, i32) {
    %c0_i32 = arith.constant 0 : i32
    %c0_i32_0 = arith.constant 0 : i32
    %c0_i32_1 = arith.constant 0 : i32
    return %c0_i32, %c0_i32_0 : i32, i32
  }
  func.func @transform_3(%arg0: i32) -> (i32, i32, i32) {
    %c0_i32 = arith.constant 0 : i32
    %c0_i32_0 = arith.constant 0 : i32
    %c0_i32_1 = arith.constant 0 : i32
    %c0_i32_2 = arith.constant 0 : i32
    return %c0_i32, %c0_i32_0, %c0_i32_1 : i32, i32, i32
  }
  func.func @transform_4(%arg0: i32) -> (i32, i32, i32) {
    %c0_i32 = arith.constant 0 : i32
    %c0_i32_0 = arith.constant 0 : i32
    %c0_i32_1 = arith.constant 0 : i32
    %c0_i32_2 = arith.constant 0 : i32
    return %c0_i32, %c0_i32_0, %c0_i32_1 : i32, i32, i32
  }
  func.func @transform_5(%arg0: i32) -> (i32, i32) {
    %c0_i32 = arith.constant 0 : i32
    %c0_i32_0 = arith.constant 0 : i32
    %c0_i32_1 = arith.constant 0 : i32
    return %c0_i32, %c0_i32_0 : i32, i32
  }
  func.func @transform_6(%arg0: i32) -> (i32, i32) {
    %c0_i32 = arith.constant 0 : i32
    %c0_i32_0 = arith.constant 0 : i32
    %c0_i32_1 = arith.constant 0 : i32
    return %c0_i32, %c0_i32_0 : i32, i32
  }
  func.func @transform_7(%arg0: i32) -> (i32, i32) {
    %c0_i32 = arith.constant 0 : i32
    %c0_i32_0 = arith.constant 0 : i32
    %c0_i32_1 = arith.constant 0 : i32
    return %c0_i32, %c0_i32_0 : i32, i32
  }
}

</mosaic_0001>

<llo_original>
// kernel: idcnn_logits_pallas.1
$region0: #{idcnn_logits_pallas.1}
  #allocation0 [shape = 'u32[]', space=smem, size = 0x4, offset = 0x4, fixed_abs, tag = 'smem constant byte address 0x4 - core index']
  #allocation1 [shape = 'u32[144,128]{1,0:T(1,128)}', space=vmem, size = 0x12000, scoped, tag = 'internal scratch']
  %s0 = inlined_call_operand.vmem [shape: f32[32,768], index: 0, kind: input, shape index: {}]
  %s1 = inlined_call_operand.vmem [shape: f32[768,32], index: 1, kind: input, shape index: {}]
  %s2 = inlined_call_operand.vmem [shape: f32[1,32], index: 2, kind: input, shape index: {}]
  %s3 = inlined_call_operand.vmem [shape: bf16[4,96,32], index: 3, kind: input, shape index: {}]
  %s4 = inlined_call_operand.vmem [shape: f32[4,1,32], index: 4, kind: input, shape index: {}]
  %s5 = inlined_call_operand.vmem [shape: f32[32,128], index: 5, kind: input, shape index: {}]
  %s6 = inlined_call_operand.vmem [shape: f32[1,128], index: 6, kind: input, shape index: {}]
  %s7 = inlined_call_operand.vmem [shape: f32[32,128], index: 7, kind: output, shape index: {}]
  %s8 = sld [smem:[#allocation0]]
  $region38: #{idcnn_logits_pallas.1} parent=0
    _
  %s10 = ssub.s32 1, %s8
  %s11 = scalar_select 0, %s10, %s8
  // Predicated region
  $region2: #{idcnn_logits_pallas.1} parent=0 // pred_check
    _
  $region3: #{idcnn_logits_pallas.1} parent=0 // pred_check_branch
    %13 = sbr.rel (0) target = $region5
  $region4: #{idcnn_logits_pallas.1} parent=0 // pred_region
    _
  $region5: #{idcnn_logits_pallas.1} parent=0 // pred_fallthru
    _
  // Predicated region
  $region6: #{idcnn_logits_pallas.1} parent=0 // pred_check
    _
  $region7: #{idcnn_logits_pallas.1} parent=0 // pred_check_branch
    %15 = sbr.rel (0) target = $region9
  $region8: #{idcnn_logits_pallas.1} parent=0 // pred_region
    _
  $region9: #{idcnn_logits_pallas.1} parent=0 // pred_fallthru
    _
  // Predicated region
  $region10: #{idcnn_logits_pallas.1} parent=0 // pred_check
    _
  $region11: #{idcnn_logits_pallas.1} parent=0 // pred_check_branch
    %17 = sbr.rel (0) target = $region13
  $region12: #{idcnn_logits_pallas.1} parent=0 // pred_region
    _
  $region13: #{idcnn_logits_pallas.1} parent=0 // pred_fallthru
    _
  // Predicated region
  $region14: #{idcnn_logits_pallas.1} parent=0 // pred_check
    _
  $region15: #{idcnn_logits_pallas.1} parent=0 // pred_check_branch
    %19 = sbr.rel (0) target = $region17
  $region16: #{idcnn_logits_pallas.1} parent=0 // pred_region
    _
  $region17: #{idcnn_logits_pallas.1} parent=0 // pred_fallthru
    _
  // Predicated region
  $region18: #{idcnn_logits_pallas.1} parent=0 // pred_check
    _
  $region19: #{idcnn_logits_pallas.1} parent=0 // pred_check_branch
    %21 = sbr.rel (0) target = $region21
  $region20: #{idcnn_logits_pallas.1} parent=0 // pred_region
    _
  $region21: #{idcnn_logits_pallas.1} parent=0 // pred_fallthru
    _
  // Predicated region
  $region22: #{idcnn_logits_pallas.1} parent=0 // pred_check
    _
  $region23: #{idcnn_logits_pallas.1} parent=0 // pred_check_branch
    %23 = sbr.rel (0) target = $region25
  $region24: #{idcnn_logits_pallas.1} parent=0 // pred_region
    _
  $region25: #{idcnn_logits_pallas.1} parent=0 // pred_fallthru
    _
  // Predicated region
  $region26: #{idcnn_logits_pallas.1} parent=0 // pred_check
    _
  $region27: #{idcnn_logits_pallas.1} parent=0 // pred_check_branch
    %25 = sbr.rel (0) target = $region29
  $region28: #{idcnn_logits_pallas.1} parent=0 // pred_region
    _
  $region29: #{idcnn_logits_pallas.1} parent=0 // pred_fallthru
    _
  %v27 = vld [vmem:[%s0] sm:$0xff]
  %v28 = vld [vmem:[%s0 + $0x8] sm:$0xff]
  %v29 = vld [vmem:[%s0 + $0x10] sm:$0xff]
  %v30 = vld [vmem:[%s0 + $0x18] sm:$0xff]
  %v31 = vld [vmem:[%s0 + $0x20] sm:$0xff]
  %v32 = vld [vmem:[%s0 + $0x28] sm:$0xff]
  %v33 = vld [vmem:[%s0 + $0x30] sm:$0xff]
  %v34 = vld [vmem:[%s0 + $0x38] sm:$0xff]
  %v35 = vld [vmem:[%s0 + $0x40] sm:$0xff]
  %v36 = vld [vmem:[%s0 + $0x48] sm:$0xff]
  %v37 = vld [vmem:[%s0 + $0x50] sm:$0xff]
  %v38 = vld [vmem:[%s0 + $0x58] sm:$0xff]
  %v39 = vld [vmem:[%s0 + $0x60] sm:$0xff]
  %v40 = vld [vmem:[%s0 + $0x68] sm:$0xff]
  %v41 = vld [vmem:[%s0 + $0x70] sm:$0xff]
  %v42 = vld [vmem:[%s0 + $0x78] sm:$0xff]
  %v43 = vld [vmem:[%s0 + $0x80] sm:$0xff]
  %v44 = vld [vmem:[%s0 + $0x88] sm:$0xff]
  %v45 = vld [vmem:[%s0 + $0x90] sm:$0xff]
  %v46 = vld [vmem:[%s0 + $0x98] sm:$0xff]
  %v47 = vld [vmem:[%s0 + $0xa0] sm:$0xff]
  %v48 = vld [vmem:[%s0 + $0xa8] sm:$0xff]
  %v49 = vld [vmem:[%s0 + $0xb0] sm:$0xff]
  %v50 = vld [vmem:[%s0 + $0xb8] sm:$0xff]
  %v51 = vld [vmem:[%s4] sm:$0x1]
  %v53 = vlaneseq
  %v54 = vshrl.u32 %v53, 7
  %v55 = vsub.s32 0, %v54
  %v56 = vrot.slane %v51, %v55
  %s58 = scalar_lea.vmem %s4, 1
  %v59 = vld [vmem:[%s58] sm:$0x1]
  %v61 = vlaneseq
  %v62 = vshrl.u32 %v61, 7
  %v63 = vsub.s32 0, %v62
  %v64 = vrot.slane %v59, %v63
  %s66 = scalar_lea.vmem %s4, 2
  %v67 = vld [vmem:[%s66] sm:$0x1]
  %v69 = vlaneseq
  %v70 = vshrl.u32 %v69, 7
  %v71 = vsub.s32 0, %v70
  %v72 = vrot.slane %v67, %v71
  %s74 = scalar_lea.vmem %s4, 3
  %v75 = vld [vmem:[%s74] sm:$0x1]
  %v77 = vlaneseq
  %v78 = vshrl.u32 %v77, 7
  %v79 = vsub.s32 0, %v78
  %v80 = vrot.slane %v75, %v79
  %v82 = vlaneseq
  %v83 = vshrl.u32 %v82, 7
  %v84 = vadd.s32 %v83, 8
  %v85 = vadd.s32 %v83, 16
  %v86 = vadd.s32 %v83, 24
  %vm87 = vcmp.lt.s32.totalorder %v83, 0
  %v88 = vsub.s32 0, %v83
  %v89 = vsel %vm87, %v88, %v83
  %v90 = vshrl.u32 %v89, 4
  %v91 = vand.u32 %v89, 15
  %v92 = vsub.s32 0, %v91
  %v93 = vsel %vm87, %v92, %v91
  %vm94 = vcmp.lt.s32.totalorder %v84, 0
  %v95 = vsub.s32 0, %v84
  %v96 = vsel %vm94, %v95, %v84
  %v97 = vshrl.u32 %v96, 4
  %v98 = vand.u32 %v96, 15
  %v99 = vsub.s32 0, %v98
  %v100 = vsel %vm94, %v99, %v98
  %vm101 = vcmp.lt.s32.totalorder %v85, 0
  %v102 = vsub.s32 0, %v85
  %v103 = vsel %vm101, %v102, %v85
  %v104 = vshrl.u32 %v103, 4
  %v105 = vand.u32 %v103, 15
  %v106 = vsub.s32 0, %v105
  %v107 = vsel %vm101, %v106, %v105
  %vm108 = vcmp.lt.s32.totalorder %v86, 0
  %v109 = vsub.s32 0, %v86
  %v110 = vsel %vm108, %v109, %v86
  %v111 = vshrl.u32 %v110, 4
  %v112 = vand.u32 %v110, 15
  %v113 = vsub.s32 0, %v112
  %v114 = vsel %vm108, %v113, %v112
  %vm115 = vcmp.ne.s32.totalorder %v93, 0
  %vm116 = vcmp.ne.s32.totalorder %v100, 0
  %vm117 = vcmp.ne.s32.totalorder %v107, 0
  %vm118 = vcmp.ne.s32.totalorder %v114, 0
  %vm119 = vcmp.lt.s32.totalorder %v93, 0
  %vm120 = vcmp.lt.s32.totalorder %v100, 0
  %vm121 = vcmp.lt.s32.totalorder %v107, 0
  %vm122 = vcmp.lt.s32.totalorder %v114, 0
  %vm123 = vmand %vm119, %vm115
  %vm124 = vmand %vm120, %vm116
  %vm125 = vmand %vm121, %vm117
  %vm126 = vmand %vm122, %vm118
  %v127 = vadd.s32 %v93, 16
  %v128 = vadd.s32 %v100, 16
  %v129 = vadd.s32 %v107, 16
  %v130 = vadd.s32 %v114, 16
  %v131 = vsel %vm123, %v127, %v93
  %v132 = vsel %vm124, %v128, %v100
  %v133 = vsel %vm125, %v129, %v107
  %v134 = vsel %vm126, %v130, %v114
  %vm135 = vcmp.ge.s32.totalorder %v131, 1
  %vm136 = vcmp.ge.s32.totalorder %v132, 1
  %vm137 = vcmp.ge.s32.totalorder %v133, 1
  %vm138 = vcmp.ge.s32.totalorder %v134, 1
  %vm139 = vcmp.lt.s32.totalorder %v131, 15
  %vm140 = vcmp.lt.s32.totalorder %v132, 15
  %vm141 = vcmp.lt.s32.totalorder %v133, 15
  %vm142 = vcmp.lt.s32.totalorder %v134, 15
  %vm143 = vcmp.ge.s32.totalorder %v131, 2
  %vm144 = vcmp.ge.s32.totalorder %v132, 2
  %vm145 = vcmp.ge.s32.totalorder %v133, 2
  %vm146 = vcmp.ge.s32.totalorder %v134, 2
  %vm147 = vcmp.lt.s32.totalorder %v131, 14
  %vm148 = vcmp.lt.s32.totalorder %v132, 14
  %vm149 = vcmp.lt.s32.totalorder %v133, 14
  %vm150 = vcmp.lt.s32.totalorder %v134, 14
  %vm151 = vcmp.ge.s32.totalorder %v131, 4
  %vm152 = vcmp.ge.s32.totalorder %v132, 4
  %vm153 = vcmp.ge.s32.totalorder %v133, 4
  %vm154 = vcmp.ge.s32.totalorder %v134, 4
  %vm155 = vcmp.lt.s32.totalorder %v131, 12
  %vm156 = vcmp.lt.s32.totalorder %v132, 12
  %vm157 = vcmp.lt.s32.totalorder %v133, 12
  %vm158 = vcmp.lt.s32.totalorder %v134, 12
  %v159 = vld [vmem:[%s1] sm:$0xff]
  %v160 = vld [vmem:[%s1 + $0x8] sm:$0xff]
  %v161 = vld [vmem:[%s1 + $0x10] sm:$0xff]
  %v162 = vld [vmem:[%s1 + $0x18] sm:$0xff]
  %v163 = vld [vmem:[%s1 + $0x20] sm:$0xff]
  %v164 = vld [vmem:[%s1 + $0x28] sm:$0xff]
  %v165 = vld [vmem:[%s1 + $0x30] sm:$0xff]
  %v166 = vld [vmem:[%s1 + $0x38] sm:$0xff]
  %v167 = vld [vmem:[%s1 + $0x40] sm:$0xff]
  %v168 = vld [vmem:[%s1 + $0x48] sm:$0xff]
  %v169 = vld [vmem:[%s1 + $0x50] sm:$0xff]
  %v170 = vld [vmem:[%s1 + $0x58] sm:$0xff]
  %v171 = vld [vmem:[%s1 + $0x60] sm:$0xff]
  %v172 = vld [vmem:[%s1 + $0x68] sm:$0xff]
  %v173 = vld [vmem:[%s1 + $0x70] sm:$0xff]
  %v174 = vld [vmem:[%s1 + $0x78] sm:$0xff]
  %v175 = vld [vmem:[%s1 + $0x80] sm:$0xff]
  %v176 = vld [vmem:[%s1 + $0x88] sm:$0xff]
  %v177 = vld [vmem:[%s1 + $0x90] sm:$0xff]
  %v178 = vld [vmem:[%s1 + $0x98] sm:$0xff]
  %v179 = vld [vmem:[%s1 + $0xa0] sm:$0xff]
  %v180 = vld [vmem:[%s1 + $0xa8] sm:$0xff]
  %v181 = vld [vmem:[%s1 + $0xb0] sm:$0xff]
  %v182 = vld [vmem:[%s1 + $0xb8] sm:$0xff]
  %v183 = vld [vmem:[%s1 + $0xc0] sm:$0xff]
  %v184 = vld [vmem:[%s1 + $0xc8] sm:$0xff]
  %v185 = vld [vmem:[%s1 + $0xd0] sm:$0xff]
  %v186 = vld [vmem:[%s1 + $0xd8] sm:$0xff]
  %v187 = vld [vmem:[%s1 + $0xe0] sm:$0xff]
  %v188 = vld [vmem:[%s1 + $0xe8] sm:$0xff]
  %v189 = vld [vmem:[%s1 + $0xf0] sm:$0xff]
  %v190 = vld [vmem:[%s1 + $0xf8] sm:$0xff]
  %v191 = vld [vmem:[%s1 + $0x100] sm:$0xff]
  %v192 = vld [vmem:[%s1 + $0x108] sm:$0xff]
  %v193 = vld [vmem:[%s1 + $0x110] sm:$0xff]
  %v194 = vld [vmem:[%s1 + $0x118] sm:$0xff]
  %v195 = vld [vmem:[%s1 + $0x120] sm:$0xff]
  %v196 = vld [vmem:[%s1 + $0x128] sm:$0xff]
  %v197 = vld [vmem:[%s1 + $0x130] sm:$0xff]
  %v198 = vld [vmem:[%s1 + $0x138] sm:$0xff]
  %v199 = vld [vmem:[%s1 + $0x140] sm:$0xff]
  %v200 = vld [vmem:[%s1 + $0x148] sm:$0xff]
  %v201 = vld [vmem:[%s1 + $0x150] sm:$0xff]
  %v202 = vld [vmem:[%s1 + $0x158] sm:$0xff]
  %v203 = vld [vmem:[%s1 + $0x160] sm:$0xff]
  %v204 = vld [vmem:[%s1 + $0x168] sm:$0xff]
  %v205 = vld [vmem:[%s1 + $0x170] sm:$0xff]
  %v206 = vld [vmem:[%s1 + $0x178] sm:$0xff]
  %v207 = vld [vmem:[%s1 + $0x180] sm:$0xff]
  %v208 = vld [vmem:[%s1 + $0x188] sm:$0xff]
  %v209 = vld [vmem:[%s1 + $0x190] sm:$0xff]
  %v210 = vld [vmem:[%s1 + $0x198] sm:$0xff]
  %v211 = vld [vmem:[%s1 + $0x1a0] sm:$0xff]
  %v212 = vld [vmem:[%s1 + $0x1a8] sm:$0xff]
  %v213 = vld [vmem:[%s1 + $0x1b0] sm:$0xff]
  %v214 = vld [vmem:[%s1 + $0x1b8] sm:$0xff]
  %v215 = vld [vmem:[%s1 + $0x1c0] sm:$0xff]
  %v216 = vld [vmem:[%s1 + $0x1c8] sm:$0xff]
  %v217 = vld [vmem:[%s1 + $0x1d0] sm:$0xff]
  %v218 = vld [vmem:[%s1 + $0x1d8] sm:$0xff]
  %v219 = vld [vmem:[%s1 + $0x1e0] sm:$0xff]
  %v220 = vld [vmem:[%s1 + $0x1e8] sm:$0xff]
  %v221 = vld [vmem:[%s1 + $0x1f0] sm:$0xff]
  %v222 = vld [vmem:[%s1 + $0x1f8] sm:$0xff]
  %v223 = vld [vmem:[%s1 + $0x200] sm:$0xff]
  %v224 = vld [vmem:[%s1 + $0x208] sm:$0xff]
  %v225 = vld [vmem:[%s1 + $0x210] sm:$0xff]
  %v226 = vld [vmem:[%s1 + $0x218] sm:$0xff]
  %v227 = vld [vmem:[%s1 + $0x220] sm:$0xff]
  %v228 = vld [vmem:[%s1 + $0x228] sm:$0xff]
  %v229 = vld [vmem:[%s1 + $0x230] sm:$0xff]
  %v230 = vld [vmem:[%s1 + $0x238] sm:$0xff]
  %v231 = vld [vmem:[%s1 + $0x240] sm:$0xff]
  %v232 = vld [vmem:[%s1 + $0x248] sm:$0xff]
  %v233 = vld [vmem:[%s1 + $0x250] sm:$0xff]
  %v234 = vld [vmem:[%s1 + $0x258] sm:$0xff]
  %v235 = vld [vmem:[%s1 + $0x260] sm:$0xff]
  %v236 = vld [vmem:[%s1 + $0x268] sm:$0xff]
  %v237 = vld [vmem:[%s1 + $0x270] sm:$0xff]
  %v238 = vld [vmem:[%s1 + $0x278] sm:$0xff]
  %v239 = vld [vmem:[%s1 + $0x280] sm:$0xff]
  %v240 = vld [vmem:[%s1 + $0x288] sm:$0xff]
  %v241 = vld [vmem:[%s1 + $0x290] sm:$0xff]
  %v242 = vld [vmem:[%s1 + $0x298] sm:$0xff]
  %v243 = vld [vmem:[%s1 + $0x2a0] sm:$0xff]
  %v244 = vld [vmem:[%s1 + $0x2a8] sm:$0xff]
  %v245 = vld [vmem:[%s1 + $0x2b0] sm:$0xff]
  %v246 = vld [vmem:[%s1 + $0x2b8] sm:$0xff]
  %v247 = vld [vmem:[%s1 + $0x2c0] sm:$0xff]
  %v248 = vld [vmem:[%s1 + $0x2c8] sm:$0xff]
  %v249 = vld [vmem:[%s1 + $0x2d0] sm:$0xff]
  %v250 = vld [vmem:[%s1 + $0x2d8] sm:$0xff]
  %v251 = vld [vmem:[%s1 + $0x2e0] sm:$0xff]
  %v252 = vld [vmem:[%s1 + $0x2e8] sm:$0xff]
  %v253 = vld [vmem:[%s1 + $0x2f0] sm:$0xff]
  %v254 = vld [vmem:[%s1 + $0x2f8] sm:$0xff]
  %v255 = vld [vmem:[%s2] sm:$0x1]
  %v257 = vlaneseq
  %v258 = vshrl.u32 %v257, 7
  %v259 = vsub.s32 0, %v258
  %v260 = vrot.slane %v255, %v259
  %262 = vmatprep.subr.mxu0 0.0
  %263 = vmatpush1.msra.mxu0 %v174
  %264 = vmatprep.subr.mxu0 0.0
  %265 = vmatpush1.msra.mxu0 %v173
  %266 = vmatprep.subr.mxu0 0.0
  %267 = vmatpush1.msra.mxu0 %v172
  %268 = vmatprep.subr.mxu0 0.0
  %269 = vmatpush1.msra.mxu0 %v171
  %270 = vmatprep.subr.mxu0 0.0
  %271 = vmatpush1.msra.mxu0 %v170
  %272 = vmatprep.subr.mxu0 0.0
  %273 = vmatpush1.msra.mxu0 %v169
  %274 = vmatprep.subr.mxu0 0.0
  %275 = vmatpush1.msra.mxu0 %v168
  %276 = vmatprep.subr.mxu0 0.0
  %277 = vmatpush1.msra.mxu0 %v167
  %278 = vmatprep.subr.mxu0 0.0
  %279 = vmatpush1.msra.mxu0 %v166
  %280 = vmatprep.subr.mxu0 0.0
  %281 = vmatpush1.msra.mxu0 %v165
  %282 = vmatprep.subr.mxu0 0.0
  %283 = vmatpush1.msra.mxu0 %v164
  %284 = vmatprep.subr.mxu0 0.0
  %285 = vmatpush1.msra.mxu0 %v163
  %286 = vmatprep.subr.mxu0 0.0
  %287 = vmatpush1.msra.mxu0 %v162
  %288 = vmatprep.subr.mxu0 0.0
  %289 = vmatpush1.msra.mxu0 %v161
  %290 = vmatprep.subr.mxu0 0.0
  %291 = vmatpush1.msra.mxu0 %v160
  %292 = vmatprep.subr.mxu0 0.0
  %293 = vmatpush1.msra.mxu0 %v159
  %294 = vmatprep.subr.mxu0 0.0
  %295 = vmatpush2.msra.mxu0 %v190
  %296 = vmatprep.subr.mxu0 0.0
  %297 = vmatpush2.msra.mxu0 %v189
  %298 = vmatprep.subr.mxu0 0.0
  %299 = vmatpush2.msra.mxu0 %v188
  %300 = vmatprep.subr.mxu0 0.0
  %301 = vmatpush2.msra.mxu0 %v187
  %302 = vmatprep.subr.mxu0 0.0
  %303 = vmatpush2.msra.mxu0 %v186
  %304 = vmatprep.subr.mxu0 0.0
  %305 = vmatpush2.msra.mxu0 %v185
  %306 = vmatprep.subr.mxu0 0.0
  %307 = vmatpush2.msra.mxu0 %v184
  %308 = vmatprep.subr.mxu0 0.0
  %309 = vmatpush2.msra.mxu0 %v183
  %310 = vmatprep.subr.mxu0 0.0
  %311 = vmatpush2.msra.mxu0 %v182
  %312 = vmatprep.subr.mxu0 0.0
  %313 = vmatpush2.msra.mxu0 %v181
  %314 = vmatprep.subr.mxu0 0.0
  %315 = vmatpush2.msra.mxu0 %v180
  %316 = vmatprep.subr.mxu0 0.0
  %317 = vmatpush2.msra.mxu0 %v179
  %318 = vmatprep.subr.mxu0 0.0
  %319 = vmatpush2.msra.mxu0 %v178
  %320 = vmatprep.subr.mxu0 0.0
  %321 = vmatpush2.msra.mxu0 %v177
  %322 = vmatprep.subr.mxu0 0.0
  %323 = vmatpush2.msra.mxu0 %v176
  %324 = vmatprep.subr.mxu0 0.0
  %325 = vmatpush2.msra.mxu0 %v175
  %326 = vmatprep.mubr.f32.mxu0 %v28
  %327 = vmatmul.mubr.f32.gmra.mxu0 %v27
  %v328 = vpop.f32.mrf.mxu0
  %v329 = vadd.f32 %v260, %v328
  %v330 = vpop.f32.mrf.mxu0
  %331 = vmatprep.mubr.f32.mxu0 %v34
  %332 = vmatmul.mubr.f32.gmra.mxu0 %v33
  %v333 = vpop.f32.mrf.mxu0
  %v334 = vadd.f32 %v260, %v333
  %v335 = vpop.f32.mrf.mxu0
  %336 = vmatprep.mubr.f32.mxu0 %v40
  %337 = vmatmul.mubr.f32.gmra.mxu0 %v39
  %v338 = vpop.f32.mrf.mxu0
  %v339 = vadd.f32 %v260, %v338
  %v340 = vpop.f32.mrf.mxu0
  %341 = vmatprep.mubr.f32.mxu0 %v46
  %342 = vmatmul.mubr.f32.gmra.mxu0 %v45
  %v343 = vpop.f32.mrf.mxu0
  %v344 = vadd.f32 %v260, %v343
  %v345 = vpop.f32.mrf.mxu0
  %346 = vdwg.mxu0
  %347 = vmatprep.subr.mxu0 0.0
  %348 = vmatpush1.msra.mxu0 %v206
  %349 = vmatprep.subr.mxu0 0.0
  %350 = vmatpush1.msra.mxu0 %v205
  %351 = vmatprep.subr.mxu0 0.0
  %352 = vmatpush1.msra.mxu0 %v204
  %353 = vmatprep.subr.mxu0 0.0
  %354 = vmatpush1.msra.mxu0 %v203
  %355 = vmatprep.subr.mxu0 0.0
  %356 = vmatpush1.msra.mxu0 %v202
  %357 = vmatprep.subr.mxu0 0.0
  %358 = vmatpush1.msra.mxu0 %v201
  %359 = vmatprep.subr.mxu0 0.0
  %360 = vmatpush1.msra.mxu0 %v200
  %361 = vmatprep.subr.mxu0 0.0
  %362 = vmatpush1.msra.mxu0 %v199
  %363 = vmatprep.subr.mxu0 0.0
  %364 = vmatpush1.msra.mxu0 %v198
  %365 = vmatprep.subr.mxu0 0.0
  %366 = vmatpush1.msra.mxu0 %v197
  %367 = vmatprep.subr.mxu0 0.0
  %368 = vmatpush1.msra.mxu0 %v196
  %369 = vmatprep.subr.mxu0 0.0
  %370 = vmatpush1.msra.mxu0 %v195
  %371 = vmatprep.subr.mxu0 0.0
  %372 = vmatpush1.msra.mxu0 %v194
  %373 = vmatprep.subr.mxu0 0.0
  %374 = vmatpush1.msra.mxu0 %v193
  %375 = vmatprep.subr.mxu0 0.0
  %376 = vmatpush1.msra.mxu0 %v192
  %377 = vmatprep.subr.mxu0 0.0
  %378 = vmatpush1.msra.mxu0 %v191
  %379 = vmatprep.subr.mxu0 0.0
  %380 = vmatpush2.msra.mxu0 %v222
  %381 = vmatprep.subr.mxu0 0.0
  %382 = vmatpush2.msra.mxu0 %v221
  %383 = vmatprep.subr.mxu0 0.0
  %384 = vmatpush2.msra.mxu0 %v220
  %385 = vmatprep.subr.mxu0 0.0
  %386 = vmatpush2.msra.mxu0 %v219
  %387 = vmatprep.subr.mxu0 0.0
  %388 = vmatpush2.msra.mxu0 %v218
  %389 = vmatprep.subr.mxu0 0.0
  %390 = vmatpush2.msra.mxu0 %v217
  %391 = vmatprep.subr.mxu0 0.0
  %392 = vmatpush2.msra.mxu0 %v216
  %393 = vmatprep.subr.mxu0 0.0
  %394 = vmatpush2.msra.mxu0 %v215
  %395 = vmatprep.subr.mxu0 0.0
  %396 = vmatpush2.msra.mxu0 %v214
  %397 = vmatprep.subr.mxu0 0.0
  %398 = vmatpush2.msra.mxu0 %v213
  %399 = vmatprep.subr.mxu0 0.0
  %400 = vmatpush2.msra.mxu0 %v212
  %401 = vmatprep.subr.mxu0 0.0
  %402 = vmatpush2.msra.mxu0 %v211
  %403 = vmatprep.subr.mxu0 0.0
  %404 = vmatpush2.msra.mxu0 %v210
  %405 = vmatprep.subr.mxu0 0.0
  %406 = vmatpush2.msra.mxu0 %v209
  %407 = vmatprep.subr.mxu0 0.0
  %408 = vmatpush2.msra.mxu0 %v208
  %409 = vmatprep.subr.mxu0 0.0
  %410 = vmatpush2.msra.mxu0 %v207
  %411 = vmatprep.mubr.f32.mxu0 %v30
  %412 = vmatmul.mubr.f32.gmra.mxu0 %v29
  %v413 = vpop.f32.mrf.mxu0
  %v414 = vadd.f32 %v329, %v413
  %v415 = vpop.f32.mrf.mxu0
  %416 = vmatprep.mubr.f32.mxu0 %v36
  %417 = vmatmul.mubr.f32.gmra.mxu0 %v35
  %v418 = vpop.f32.mrf.mxu0
  %v419 = vadd.f32 %v334, %v418
  %v420 = vpop.f32.mrf.mxu0
  %421 = vmatprep.mubr.f32.mxu0 %v42
  %422 = vmatmul.mubr.f32.gmra.mxu0 %v41
  %v423 = vpop.f32.mrf.mxu0
  %v424 = vadd.f32 %v339, %v423
  %v425 = vpop.f32.mrf.mxu0
  %426 = vmatprep.mubr.f32.mxu0 %v48
  %427 = vmatmul.mubr.f32.gmra.mxu0 %v47
  %v428 = vpop.f32.mrf.mxu0
  %v429 = vadd.f32 %v344, %v428
  %v430 = vpop.f32.mrf.mxu0
  %431 = vdwg.mxu0
  %432 = vmatprep.subr.mxu0 0.0
  %433 = vmatpush1.msra.mxu0 %v238
  %434 = vmatprep.subr.mxu0 0.0
  %435 = vmatpush1.msra.mxu0 %v237
  %436 = vmatprep.subr.mxu0 0.0
  %437 = vmatpush1.msra.mxu0 %v236
  %438 = vmatprep.subr.mxu0 0.0
  %439 = vmatpush1.msra.mxu0 %v235
  %440 = vmatprep.subr.mxu0 0.0
  %441 = vmatpush1.msra.mxu0 %v234
  %442 = vmatprep.subr.mxu0 0.0
  %443 = vmatpush1.msra.mxu0 %v233
  %444 = vmatprep.subr.mxu0 0.0
  %445 = vmatpush1.msra.mxu0 %v232
  %446 = vmatprep.subr.mxu0 0.0
  %447 = vmatpush1.msra.mxu0 %v231
  %448 = vmatprep.subr.mxu0 0.0
  %449 = vmatpush1.msra.mxu0 %v230
  %450 = vmatprep.subr.mxu0 0.0
  %451 = vmatpush1.msra.mxu0 %v229
  %452 = vmatprep.subr.mxu0 0.0
  %453 = vmatpush1.msra.mxu0 %v228
  %454 = vmatprep.subr.mxu0 0.0
  %455 = vmatpush1.msra.mxu0 %v227
  %456 = vmatprep.subr.mxu0 0.0
  %457 = vmatpush1.msra.mxu0 %v226
  %458 = vmatprep.subr.mxu0 0.0
  %459 = vmatpush1.msra.mxu0 %v225
  %460 = vmatprep.subr.mxu0 0.0
  %461 = vmatpush1.msra.mxu0 %v224
  %462 = vmatprep.subr.mxu0 0.0
  %463 = vmatpush1.msra.mxu0 %v223
  %464 = vmatprep.subr.mxu0 0.0
  %465 = vmatpush2.msra.mxu0 %v254
  %466 = vmatprep.subr.mxu0 0.0
  %467 = vmatpush2.msra.mxu0 %v253
  %468 = vmatprep.subr.mxu0 0.0
  %469 = vmatpush2.msra.mxu0 %v252
  %470 = vmatprep.subr.mxu0 0.0
  %471 = vmatpush2.msra.mxu0 %v251
  %472 = vmatprep.subr.mxu0 0.0
  %473 = vmatpush2.msra.mxu0 %v250
  %474 = vmatprep.subr.mxu0 0.0
  %475 = vmatpush2.msra.mxu0 %v249
  %476 = vmatprep.subr.mxu0 0.0
  %477 = vmatpush2.msra.mxu0 %v248
  %478 = vmatprep.subr.mxu0 0.0
  %479 = vmatpush2.msra.mxu0 %v247
  %480 = vmatprep.subr.mxu0 0.0
  %481 = vmatpush2.msra.mxu0 %v246
  %482 = vmatprep.subr.mxu0 0.0
  %483 = vmatpush2.msra.mxu0 %v245
  %484 = vmatprep.subr.mxu0 0.0
  %485 = vmatpush2.msra.mxu0 %v244
  %486 = vmatprep.subr.mxu0 0.0
  %487 = vmatpush2.msra.mxu0 %v243
  %488 = vmatprep.subr.mxu0 0.0
  %489 = vmatpush2.msra.mxu0 %v242
  %490 = vmatprep.subr.mxu0 0.0
  %491 = vmatpush2.msra.mxu0 %v241
  %492 = vmatprep.subr.mxu0 0.0
  %493 = vmatpush2.msra.mxu0 %v240
  %494 = vmatprep.subr.mxu0 0.0
  %495 = vmatpush2.msra.mxu0 %v239
  %496 = vmatprep.mubr.f32.mxu0 %v32
  %497 = vmatmul.mubr.f32.gmra.mxu0 %v31
  %v498 = vpop.f32.mrf.mxu0
  %v499 = vadd.f32 %v414, %v498
  %v500 = vpop.f32.mrf.mxu0
  %501 = vmatprep.mubr.f32.mxu0 %v38
  %502 = vmatmul.mubr.f32.gmra.mxu0 %v37
  %v503 = vpop.f32.mrf.mxu0
  %v504 = vadd.f32 %v419, %v503
  %v505 = vpop.f32.mrf.mxu0
  %506 = vmatprep.mubr.f32.mxu0 %v44
  %507 = vmatmul.mubr.f32.gmra.mxu0 %v43
  %v508 = vpop.f32.mrf.mxu0
  %v509 = vadd.f32 %v424, %v508
  %v510 = vpop.f32.mrf.mxu0
  %511 = vmatprep.mubr.f32.mxu0 %v50
  %512 = vmatmul.mubr.f32.gmra.mxu0 %v49
  %v513 = vpop.f32.mrf.mxu0
  %v514 = vadd.f32 %v429, %v513
  %v515 = vpop.f32.mrf.mxu0
  %516 = vdwg.mxu0
  %v517 = vrot.slane %v499, 7
  %v518 = vrot.slane %v504, 7
  %v519 = vrot.slane %v509, 7
  %v520 = vrot.slane %v514, 7
  %vm521 = vcmp.lt.s32.totalorder %v83, 1
  %v522 = vsel %vm521, %v519, %v520
  %v523 = vsel %vm521, %v518, %v519
  %v524 = vsel %vm521, %v517, %v518
  %v525 = vsel %vm521, %v520, %v517
  %v526 = vsel %vm135, %v525, 0.0
  %v527 = vsel %vm136, %v524, 0.0
  %v528 = vsel %vm137, %v523, 0.0
  %v529 = vsel %vm138, %v522, 0.0
  %v530 = vrot.slane %v499, 1
  %v531 = vrot.slane %v504, 1
  %v532 = vrot.slane %v509, 1
  %v533 = vrot.slane %v514, 1
  %vm534 = vcmp.lt.s32.totalorder %v83, 7
  %v535 = vsel %vm534, %v532, %v533
  %v536 = vsel %vm534, %v531, %v532
  %v537 = vsel %vm534, %v530, %v531
  %v538 = vsel %vm534, %v533, %v530
  %v539 = vsel %vm139, %v537, 0.0
  %v540 = vsel %vm140, %v536, 0.0
  %v541 = vsel %vm141, %v535, 0.0
  %v542 = vsel %vm142, %v538, 0.0
  %547 = vrot.lane.b32.xlu0 %v499, 32
  %v548 = vpop.permute.xlu0 %547
  %549 = vrot.lane.b32.xlu0 %v504, 32
  %v550 = vpop.permute.xlu0 %549
  %551 = vrot.lane.b32.xlu0 %v509, 32
  %v552 = vpop.permute.xlu0 %551
  %553 = vrot.lane.b32.xlu0 %v514, 32
  %v554 = vpop.permute.xlu0 %553
  %563 = vrot.lane.b32.xlu0 %v539, 64
  %v564 = vpop.permute.xlu0 %563
  %565 = vrot.lane.b32.xlu0 %v540, 64
  %v566 = vpop.permute.xlu0 %565
  %567 = vrot.lane.b32.xlu0 %v541, 64
  %v568 = vpop.permute.xlu0 %567
  %569 = vrot.lane.b32.xlu0 %v542, 64
  %v570 = vpop.permute.xlu0 %569
  %vm575 = vcmask 261120
  %v576 = vsel %vm575, %v526, %v548
  %v577 = vsel %vm575, %v527, %v550
  %v578 = vsel %vm575, %v528, %v552
  %v579 = vsel %vm575, %v529, %v554
  %vm580 = vcmask 523264
  %v581 = vsel %vm580, %v576, %v564
  %v582 = vsel %vm580, %v577, %v566
  %v583 = vsel %vm580, %v578, %v568
  %v584 = vsel %vm580, %v579, %v570
  %v585 = vpack.c.bf16 %v582, %v581
  %v586 = vpack.c.bf16 %v584, %v583
  %v587 = vld [vmem:[%s3] sm:$0xf]
  %v588 = vld [vmem:[%s3 + $0x4] sm:$0xf]
  %v589 = vld [vmem:[%s3 + $0x8] sm:$0xf]
  %v590 = vld [vmem:[%s3 + $0xc] sm:$0xf]
  %v591 = vld [vmem:[%s3 + $0x10] sm:$0xf]
  %v592 = vld [vmem:[%s3 + $0x14] sm:$0xf]
  %v593 = vld [vmem:[%s3 + $0x18] sm:$0xf]
  %v594 = vld [vmem:[%s3 + $0x1c] sm:$0xf]
  %v595 = vld [vmem:[%s3 + $0x20] sm:$0xf]
  %v596 = vld [vmem:[%s3 + $0x24] sm:$0xf]
  %v597 = vld [vmem:[%s3 + $0x28] sm:$0xf]
  %v598 = vld [vmem:[%s3 + $0x2c] sm:$0xf]
  %v611 = vunpack.c.l.b16 %v587
  %v612 = vunpack.c.l.b16 %v588
  %v613 = vunpack.c.l.b16 %v589
  %v614 = vunpack.c.l.b16 %v590
  %v615 = vunpack.c.l.b16 %v591
  %v616 = vunpack.c.l.b16 %v592
  %v617 = vunpack.c.l.b16 %v593
  %v618 = vunpack.c.l.b16 %v594
  %v619 = vunpack.c.l.b16 %v595
  %v620 = vunpack.c.l.b16 %v596
  %v621 = vunpack.c.l.b16 %v597
  %v622 = vunpack.c.l.b16 %v598
  %v623 = vpack.c.b16 %v612, %v611
  %v624 = vpack.c.b16 %v614, %v613
  %v625 = vpack.c.b16 %v616, %v615
  %v626 = vpack.c.b16 %v618, %v617
  %v627 = vpack.c.b16 %v620, %v619
  %v628 = vpack.c.b16 %v622, %v621
  %vm635 = vcmask 785408
  %v637 = vsel %vm635, %v585, 0
  %v640 = vsel %vm635, %v586, 0
  %642 = vmatprep.subr.bf16.mxu0 0
  %643 = vmatpush1.bf16.msra.mxu0 0
  %644 = vmatprep.subr.bf16.mxu0 0
  %645 = vmatpush1.bf16.msra.mxu0 0
  %646 = vmatprep.subr.bf16.mxu0 0
  %647 = vmatpush1.bf16.msra.mxu0 %v628
  %648 = vmatprep.subr.bf16.mxu0 0
  %649 = vmatpush1.bf16.msra.mxu0 %v627
  %650 = vmatprep.subr.bf16.mxu0 0
  %651 = vmatpush1.bf16.msra.mxu0 %v626
  %652 = vmatprep.subr.bf16.mxu0 0
  %653 = vmatpush1.bf16.msra.mxu0 %v625
  %654 = vmatprep.subr.bf16.mxu0 0
  %655 = vmatpush1.bf16.msra.mxu0 %v624
  %656 = vmatprep.subr.bf16.mxu0 0
  %657 = vmatpush1.bf16.msra.mxu0 %v623
  %658 = vmatprep.subr.bf16.mxu0 0
  %659 = vmatpush2.bf16.msra.mxu0 0
  %660 = vmatprep.subr.bf16.mxu0 0
  %661 = vmatpush2.bf16.msra.mxu0 0
  %662 = vmatprep.subr.bf16.mxu0 0
  %663 = vmatpush2.bf16.msra.mxu0 0
  %664 = vmatprep.subr.bf16.mxu0 0
  %665 = vmatpush2.bf16.msra.mxu0 0
  %666 = vmatprep.subr.bf16.mxu0 0
  %667 = vmatpush2.bf16.msra.mxu0 0
  %668 = vmatprep.subr.bf16.mxu0 0
  %669 = vmatpush2.bf16.msra.mxu0 0
  %670 = vmatprep.subr.bf16.mxu0 0
  %671 = vmatpush2.bf16.msra.mxu0 0
  %672 = vmatprep.subr.bf16.mxu0 0
  %673 = vmatpush2.bf16.msra.mxu0 0
  %674 = vmatprep.mubr.bf16.mxu0 0
  %675 = vmatmul.mubr.bf16.gmra.mxu0 %v637
  %v676 = vpop.f32.mrf.mxu0
  %v677 = vadd.f32 %v56, %v676
  %v678 = vpop.f32.mrf.mxu0
  %v679 = vpop.f32.mrf.mxu0
  %v680 = vadd.f32 %v56, %v679
  %v681 = vpop.f32.mrf.mxu0
  %682 = vmatprep.mubr.bf16.mxu0 0
  %683 = vmatmul.mubr.bf16.gmra.mxu0 %v640
  %v684 = vpop.f32.mrf.mxu0
  %v685 = vadd.f32 %v56, %v684
  %v686 = vpop.f32.mrf.mxu0
  %v687 = vpop.f32.mrf.mxu0
  %v688 = vadd.f32 %v56, %v687
  %v689 = vpop.f32.mrf.mxu0
  %690 = vdwg.mxu0
  %v691 = vmax.f32 %v677, 0.0
  %v692 = vmax.f32 %v680, 0.0
  %v693 = vmax.f32 %v685, 0.0
  %v694 = vmax.f32 %v688, 0.0
  %v695 = vrot.slane %v691, 6
  %v696 = vrot.slane %v692, 6
  %v697 = vrot.slane %v693, 6
  %v698 = vrot.slane %v694, 6
  %vm699 = vcmp.lt.s32.totalorder %v83, 2
  %v700 = vsel %vm699, %v697, %v698
  %v701 = vsel %vm699, %v696, %v697
  %v702 = vsel %vm699, %v695, %v696
  %v703 = vsel %vm699, %v698, %v695
  %v704 = vsel %vm143, %v703, 0.0
  %v705 = vsel %vm144, %v702, 0.0
  %v706 = vsel %vm145, %v701, 0.0
  %v707 = vsel %vm146, %v700, 0.0
  %v708 = vrot.slane %v691, 2
  %v709 = vrot.slane %v692, 2
  %v710 = vrot.slane %v693, 2
  %v711 = vrot.slane %v694, 2
  %vm712 = vcmp.lt.s32.totalorder %v83, 6
  %v713 = vsel %vm712, %v710, %v711
  %v714 = vsel %vm712, %v709, %v710
  %v715 = vsel %vm712, %v708, %v709
  %v716 = vsel %vm712, %v711, %v708
  %v717 = vsel %vm147, %v715, 0.0
  %v718 = vsel %vm148, %v714, 0.0
  %v719 = vsel %vm149, %v713, 0.0
  %v720 = vsel %vm150, %v716, 0.0
  %725 = vrot.lane.b32.xlu0 %v691, 32
  %v726 = vpop.permute.xlu0 %725
  %727 = vrot.lane.b32.xlu0 %v692, 32
  %v728 = vpop.permute.xlu0 %727
  %729 = vrot.lane.b32.xlu0 %v693, 32
  %v730 = vpop.permute.xlu0 %729
  %731 = vrot.lane.b32.xlu0 %v694, 32
  %v732 = vpop.permute.xlu0 %731
  %741 = vrot.lane.b32.xlu0 %v717, 64
  %v742 = vpop.permute.xlu0 %741
  %743 = vrot.lane.b32.xlu0 %v718, 64
  %v744 = vpop.permute.xlu0 %743
  %745 = vrot.lane.b32.xlu0 %v719, 64
  %v746 = vpop.permute.xlu0 %745
  %747 = vrot.lane.b32.xlu0 %v720, 64
  %v748 = vpop.permute.xlu0 %747
  %v753 = vsel %vm575, %v704, %v726
  %v754 = vsel %vm575, %v705, %v728
  %v755 = vsel %vm575, %v706, %v730
  %v756 = vsel %vm575, %v707, %v732
  %v757 = vsel %vm580, %v753, %v742
  %v758 = vsel %vm580, %v754, %v744
  %v759 = vsel %vm580, %v755, %v746
  %v760 = vsel %vm580, %v756, %v748
  %v761 = vpack.c.bf16 %v758, %v757
  %v762 = vpack.c.bf16 %v760, %v759
  %s763 = scalar_lea.vmem %s3, 48
  %v764 = vld [vmem:[%s763] sm:$0xf]
  %v765 = vld [vmem:[%s763 + $0x4] sm:$0xf]
  %v766 = vld [vmem:[%s763 + $0x8] sm:$0xf]
  %v767 = vld [vmem:[%s763 + $0xc] sm:$0xf]
  %v768 = vld [vmem:[%s763 + $0x10] sm:$0xf]
  %v769 = vld [vmem:[%s763 + $0x14] sm:$0xf]
  %v770 = vld [vmem:[%s763 + $0x18] sm:$0xf]
  %v771 = vld [vmem:[%s763 + $0x1c] sm:$0xf]
  %v772 = vld [vmem:[%s763 + $0x20] sm:$0xf]
  %v773 = vld [vmem:[%s763 + $0x24] sm:$0xf]
  %v774 = vld [vmem:[%s763 + $0x28] sm:$0xf]
  %v775 = vld [vmem:[%s763 + $0x2c] sm:$0xf]
  %v788 = vunpack.c.l.b16 %v764
  %v789 = vunpack.c.l.b16 %v765
  %v790 = vunpack.c.l.b16 %v766
  %v791 = vunpack.c.l.b16 %v767
  %v792 = vunpack.c.l.b16 %v768
  %v793 = vunpack.c.l.b16 %v769
  %v794 = vunpack.c.l.b16 %v770
  %v795 = vunpack.c.l.b16 %v771
  %v796 = vunpack.c.l.b16 %v772
  %v797 = vunpack.c.l.b16 %v773
  %v798 = vunpack.c.l.b16 %v774
  %v799 = vunpack.c.l.b16 %v775
  %v800 = vpack.c.b16 %v789, %v788
  %v801 = vpack.c.b16 %v791, %v790
  %v802 = vpack.c.b16 %v793, %v792
  %v803 = vpack.c.b16 %v795, %v794
  %v804 = vpack.c.b16 %v797, %v796
  %v805 = vpack.c.b16 %v799, %v798
  %v813 = vsel %vm635, %v761, 0
  %v816 = vsel %vm635, %v762, 0
  %818 = vmatprep.subr.bf16.mxu0 0
  %819 = vmatpush1.bf16.msra.mxu0 0
  %820 = vmatprep.subr.bf16.mxu0 0
  %821 = vmatpush1.bf16.msra.mxu0 0
  %822 = vmatprep.subr.bf16.mxu0 0
  %823 = vmatpush1.bf16.msra.mxu0 %v805
  %824 = vmatprep.subr.bf16.mxu0 0
  %825 = vmatpush1.bf16.msra.mxu0 %v804
  %826 = vmatprep.subr.bf16.mxu0 0
  %827 = vmatpush1.bf16.msra.mxu0 %v803
  %828 = vmatprep.subr.bf16.mxu0 0
  %829 = vmatpush1.bf16.msra.mxu0 %v802
  %830 = vmatprep.subr.bf16.mxu0 0
  %831 = vmatpush1.bf16.msra.mxu0 %v801
  %832 = vmatprep.subr.bf16.mxu0 0
  %833 = vmatpush1.bf16.msra.mxu0 %v800
  %834 = vmatprep.subr.bf16.mxu0 0
  %835 = vmatpush2.bf16.msra.mxu0 0
  %836 = vmatprep.subr.bf16.mxu0 0
  %837 = vmatpush2.bf16.msra.mxu0 0
  %838 = vmatprep.subr.bf16.mxu0 0
  %839 = vmatpush2.bf16.msra.mxu0 0
  %840 = vmatprep.subr.bf16.mxu0 0
  %841 = vmatpush2.bf16.msra.mxu0 0
  %842 = vmatprep.subr.bf16.mxu0 0
  %843 = vmatpush2.bf16.msra.mxu0 0
  %844 = vmatprep.subr.bf16.mxu0 0
  %845 = vmatpush2.bf16.msra.mxu0 0
  %846 = vmatprep.subr.bf16.mxu0 0
  %847 = vmatpush2.bf16.msra.mxu0 0
  %848 = vmatprep.subr.bf16.mxu0 0
  %849 = vmatpush2.bf16.msra.mxu0 0
  %850 = vmatprep.mubr.bf16.mxu0 0
  %851 = vmatmul.mubr.bf16.gmra.mxu0 %v813
  %v852 = vpop.f32.mrf.mxu0
  %v853 = vadd.f32 %v64, %v852
  %v854 = vpop.f32.mrf.mxu0
  %v855 = vpop.f32.mrf.mxu0
  %v856 = vadd.f32 %v64, %v855
  %v857 = vpop.f32.mrf.mxu0
  %858 = vmatprep.mubr.bf16.mxu0 0
  %859 = vmatmul.mubr.bf16.gmra.mxu0 %v816
  %v860 = vpop.f32.mrf.mxu0
  %v861 = vadd.f32 %v64, %v860
  %v862 = vpop.f32.mrf.mxu0
  %v863 = vpop.f32.mrf.mxu0
  %v864 = vadd.f32 %v64, %v863
  %v865 = vpop.f32.mrf.mxu0
  %866 = vdwg.mxu0
  %v867 = vrot.slane %v853, 4
  %v868 = vrot.slane %v856, 4
  %v869 = vrot.slane %v861, 4
  %v870 = vrot.slane %v864, 4
  %vm871 = vcmp.lt.s32.totalorder %v83, 4
  %v872 = vsel %vm871, %v869, %v870
  %v873 = vsel %vm871, %v868, %v869
  %v874 = vsel %vm871, %v867, %v868
  %v875 = vsel %vm871, %v870, %v867
  %v876 = vsel %vm151, %v875, 0.0
  %v877 = vsel %vm152, %v874, 0.0
  %v878 = vsel %vm153, %v873, 0.0
  %v879 = vsel %vm154, %v872, 0.0
  %v880 = vsel %vm155, %v874, 0.0
  %v881 = vsel %vm156, %v873, 0.0
  %v882 = vsel %vm157, %v872, 0.0
  %v883 = vsel %vm158, %v875, 0.0
  %888 = vrot.lane.b32.xlu0 %v853, 32
  %v889 = vpop.permute.xlu0 %888
  %890 = vrot.lane.b32.xlu0 %v856, 32
  %v891 = vpop.permute.xlu0 %890
  %892 = vrot.lane.b32.xlu0 %v861, 32
  %v893 = vpop.permute.xlu0 %892
  %894 = vrot.lane.b32.xlu0 %v864, 32
  %v895 = vpop.permute.xlu0 %894
  %904 = vrot.lane.b32.xlu0 %v880, 64
  %v905 = vpop.permute.xlu0 %904
  %906 = vrot.lane.b32.xlu0 %v881, 64
  %v907 = vpop.permute.xlu0 %906
  %908 = vrot.lane.b32.xlu0 %v882, 64
  %v909 = vpop.permute.xlu0 %908
  %910 = vrot.lane.b32.xlu0 %v883, 64
  %v911 = vpop.permute.xlu0 %910
  %v916 = vsel %vm575, %v876, %v889
  %v917 = vsel %vm575, %v877, %v891
  %v918 = vsel %vm575, %v878, %v893
  %v919 = vsel %vm575, %v879, %v895
  %v920 = vsel %vm580, %v916, %v905
  %v921 = vsel %vm580, %v917, %v907
  %v922 = vsel %vm580, %v918, %v909
  %v923 = vsel %vm580, %v919, %v911
  %v924 = vpack.c.bf16 %v921, %v920
  %v925 = vpack.c.bf16 %v923, %v922
  %s926 = scalar_lea.vmem %s3, 96
  %v927 = vld [vmem:[%s926] sm:$0xf]
  %v928 = vld [vmem:[%s926 + $0x4] sm:$0xf]
  %v929 = vld [vmem:[%s926 + $0x8] sm:$0xf]
  %v930 = vld [vmem:[%s926 + $0xc] sm:$0xf]
  %v931 = vld [vmem:[%s926 + $0x10] sm:$0xf]
  %v932 = vld [vmem:[%s926 + $0x14] sm:$0xf]
  %v933 = vld [vmem:[%s926 + $0x18] sm:$0xf]
  %v934 = vld [vmem:[%s926 + $0x1c] sm:$0xf]
  %v935 = vld [vmem:[%s926 + $0x20] sm:$0xf]
  %v936 = vld [vmem:[%s926 + $0x24] sm:$0xf]
  %v937 = vld [vmem:[%s926 + $0x28] sm:$0xf]
  %v938 = vld [vmem:[%s926 + $0x2c] sm:$0xf]
  %v951 = vunpack.c.l.b16 %v927
  %v952 = vunpack.c.l.b16 %v928
  %v953 = vunpack.c.l.b16 %v929
  %v954 = vunpack.c.l.b16 %v930
  %v955 = vunpack.c.l.b16 %v931
  %v956 = vunpack.c.l.b16 %v932
  %v957 = vunpack.c.l.b16 %v933
  %v958 = vunpack.c.l.b16 %v934
  %v959 = vunpack.c.l.b16 %v935
  %v960 = vunpack.c.l.b16 %v936
  %v961 = vunpack.c.l.b16 %v937
  %v962 = vunpack.c.l.b16 %v938
  %v963 = vpack.c.b16 %v952, %v951
  %v964 = vpack.c.b16 %v954, %v953
  %v965 = vpack.c.b16 %v956, %v955
  %v966 = vpack.c.b16 %v958, %v957
  %v967 = vpack.c.b16 %v960, %v959
  %v968 = vpack.c.b16 %v962, %v961
  %v976 = vsel %vm635, %v924, 0
  %v979 = vsel %vm635, %v925, 0
  %981 = vmatprep.subr.bf16.mxu0 0
  %982 = vmatpush1.bf16.msra.mxu0 0
  %983 = vmatprep.subr.bf16.mxu0 0
  %984 = vmatpush1.bf16.msra.mxu0 0
  %985 = vmatprep.subr.bf16.mxu0 0
  %986 = vmatpush1.bf16.msra.mxu0 %v968
  %987 = vmatprep.subr.bf16.mxu0 0
  %988 = vmatpush1.bf16.msra.mxu0 %v967
  %989 = vmatprep.subr.bf16.mxu0 0
  %990 = vmatpush1.bf16.msra.mxu0 %v966
  %991 = vmatprep.subr.bf16.mxu0 0
  %992 = vmatpush1.bf16.msra.mxu0 %v965
  %993 = vmatprep.subr.bf16.mxu0 0
  %994 = vmatpush1.bf16.msra.mxu0 %v964
  %995 = vmatprep.subr.bf16.mxu0 0
  %996 = vmatpush1.bf16.msra.mxu0 %v963
  %997 = vmatprep.subr.bf16.mxu0 0
  %998 = vmatpush2.bf16.msra.mxu0 0
  %999 = vmatprep.subr.bf16.mxu0 0
  %1000 = vmatpush2.bf16.msra.mxu0 0
  %1001 = vmatprep.subr.bf16.mxu0 0
  %1002 = vmatpush2.bf16.msra.mxu0 0
  %1003 = vmatprep.subr.bf16.mxu0 0
  %1004 = vmatpush2.bf16.msra.mxu0 0
  %1005 = vmatprep.subr.bf16.mxu0 0
  %1006 = vmatpush2.bf16.msra.mxu0 0
  %1007 = vmatprep.subr.bf16.mxu0 0
  %1008 = vmatpush2.bf16.msra.mxu0 0
  %1009 = vmatprep.subr.bf16.mxu0 0
  %1010 = vmatpush2.bf16.msra.mxu0 0
  %1011 = vmatprep.subr.bf16.mxu0 0
  %1012 = vmatpush2.bf16.msra.mxu0 0
  %1013 = vmatprep.mubr.bf16.mxu0 0
  %1014 = vmatmul.mubr.bf16.gmra.mxu0 %v976
  %v1015 = vpop.f32.mrf.mxu0
  %v1016 = vadd.f32 %v72, %v1015
  %v1017 = vpop.f32.mrf.mxu0
  %v1018 = vpop.f32.mrf.mxu0
  %v1019 = vadd.f32 %v72, %v1018
  %v1020 = vpop.f32.mrf.mxu0
  %1021 = vmatprep.mubr.bf16.mxu0 0
  %1022 = vmatmul.mubr.bf16.gmra.mxu0 %v979
  %v1023 = vpop.f32.mrf.mxu0
  %v1024 = vadd.f32 %v72, %v1023
  %v1025 = vpop.f32.mrf.mxu0
  %v1026 = vpop.f32.mrf.mxu0
  %v1027 = vadd.f32 %v72, %v1026
  %v1028 = vpop.f32.mrf.mxu0
  %1029 = vdwg.mxu0
  %v1030 = vrot.slane %v1016, 7
  %v1031 = vrot.slane %v1019, 7
  %v1032 = vrot.slane %v1024, 7
  %v1033 = vrot.slane %v1027, 7
  %v1034 = vsel %vm521, %v1032, %v1033
  %v1035 = vsel %vm521, %v1031, %v1032
  %v1036 = vsel %vm521, %v1030, %v1031
  %v1037 = vsel %vm521, %v1033, %v1030
  %v1038 = vsel %vm135, %v1037, 0.0
  %v1039 = vsel %vm136, %v1036, 0.0
  %v1040 = vsel %vm137, %v1035, 0.0
  %v1041 = vsel %vm138, %v1034, 0.0
  %v1042 = vrot.slane %v1016, 1
  %v1043 = vrot.slane %v1019, 1
  %v1044 = vrot.slane %v1024, 1
  %v1045 = vrot.slane %v1027, 1
  %v1046 = vsel %vm534, %v1044, %v1045
  %v1047 = vsel %vm534, %v1043, %v1044
  %v1048 = vsel %vm534, %v1042, %v1043
  %v1049 = vsel %vm534, %v1045, %v1042
  %v1050 = vsel %vm139, %v1048, 0.0
  %v1051 = vsel %vm140, %v1047, 0.0
  %v1052 = vsel %vm141, %v1046, 0.0
  %v1053 = vsel %vm142, %v1049, 0.0
  %1058 = vrot.lane.b32.xlu0 %v1016, 32
  %v1059 = vpop.permute.xlu0 %1058
  %1060 = vrot.lane.b32.xlu0 %v1019, 32
  %v1061 = vpop.permute.xlu0 %1060
  %1062 = vrot.lane.b32.xlu0 %v1024, 32
  %v1063 = vpop.permute.xlu0 %1062
  %1064 = vrot.lane.b32.xlu0 %v1027, 32
  %v1065 = vpop.permute.xlu0 %1064
  %1074 = vrot.lane.b32.xlu0 %v1050, 64
  %v1075 = vpop.permute.xlu0 %1074
  %1076 = vrot.lane.b32.xlu0 %v1051, 64
  %v1077 = vpop.permute.xlu0 %1076
  %1078 = vrot.lane.b32.xlu0 %v1052, 64
  %v1079 = vpop.permute.xlu0 %1078
  %1080 = vrot.lane.b32.xlu0 %v1053, 64
  %v1081 = vpop.permute.xlu0 %1080
  %v1086 = vsel %vm575, %v1038, %v1059
  %v1087 = vsel %vm575, %v1039, %v1061
  %v1088 = vsel %vm575, %v1040, %v1063
  %v1089 = vsel %vm575, %v1041, %v1065
  %v1090 = vsel %vm580, %v1086, %v1075
  %v1091 = vsel %vm580, %v1087, %v1077
  %v1092 = vsel %vm580, %v1088, %v1079
  %v1093 = vsel %vm580, %v1089, %v1081
  %v1094 = vpack.c.bf16 %v1091, %v1090
  %v1095 = vpack.c.bf16 %v1093, %v1092
  %s1096 = scalar_lea.vmem %s3, 144
  %v1097 = vld [vmem:[%s1096] sm:$0xf]
  %v1098 = vld [vmem:[%s1096 + $0x4] sm:$0xf]
  %v1099 = vld [vmem:[%s1096 + $0x8] sm:$0xf]
  %v1100 = vld [vmem:[%s1096 + $0xc] sm:$0xf]
  %v1101 = vld [vmem:[%s1096 + $0x10] sm:$0xf]
  %v1102 = vld [vmem:[%s1096 + $0x14] sm:$0xf]
  %v1103 = vld [vmem:[%s1096 + $0x18] sm:$0xf]
  %v1104 = vld [vmem:[%s1096 + $0x1c] sm:$0xf]
  %v1105 = vld [vmem:[%s1096 + $0x20] sm:$0xf]
  %v1106 = vld [vmem:[%s1096 + $0x24] sm:$0xf]
  %v1107 = vld [vmem:[%s1096 + $0x28] sm:$0xf]
  %v1108 = vld [vmem:[%s1096 + $0x2c] sm:$0xf]
  %v1121 = vunpack.c.l.b16 %v1097
  %v1122 = vunpack.c.l.b16 %v1098
  %v1123 = vunpack.c.l.b16 %v1099
  %v1124 = vunpack.c.l.b16 %v1100
  %v1125 = vunpack.c.l.b16 %v1101
  %v1126 = vunpack.c.l.b16 %v1102
  %v1127 = vunpack.c.l.b16 %v1103
  %v1128 = vunpack.c.l.b16 %v1104
  %v1129 = vunpack.c.l.b16 %v1105
  %v1130 = vunpack.c.l.b16 %v1106
  %v1131 = vunpack.c.l.b16 %v1107
  %v1132 = vunpack.c.l.b16 %v1108
  %v1133 = vpack.c.b16 %v1122, %v1121
  %v1134 = vpack.c.b16 %v1124, %v1123
  %v1135 = vpack.c.b16 %v1126, %v1125
  %v1136 = vpack.c.b16 %v1128, %v1127
  %v1137 = vpack.c.b16 %v1130, %v1129
  %v1138 = vpack.c.b16 %v1132, %v1131
  %v1146 = vsel %vm635, %v1094, 0
  %v1149 = vsel %vm635, %v1095, 0
  %1151 = vmatprep.subr.bf16.mxu0 0
  %1152 = vmatpush1.bf16.msra.mxu0 0
  %1153 = vmatprep.subr.bf16.mxu0 0
  %1154 = vmatpush1.bf16.msra.mxu0 0
  %1155 = vmatprep.subr.bf16.mxu0 0
  %1156 = vmatpush1.bf16.msra.mxu0 %v1138
  %1157 = vmatprep.subr.bf16.mxu0 0
  %1158 = vmatpush1.bf16.msra.mxu0 %v1137
  %1159 = vmatprep.subr.bf16.mxu0 0
  %1160 = vmatpush1.bf16.msra.mxu0 %v1136
  %1161 = vmatprep.subr.bf16.mxu0 0
  %1162 = vmatpush1.bf16.msra.mxu0 %v1135
  %1163 = vmatprep.subr.bf16.mxu0 0
  %1164 = vmatpush1.bf16.msra.mxu0 %v1134
  %1165 = vmatprep.subr.bf16.mxu0 0
  %1166 = vmatpush1.bf16.msra.mxu0 %v1133
  %1167 = vmatprep.subr.bf16.mxu0 0
  %1168 = vmatpush2.bf16.msra.mxu0 0
  %1169 = vmatprep.subr.bf16.mxu0 0
  %1170 = vmatpush2.bf16.msra.mxu0 0
  %1171 = vmatprep.subr.bf16.mxu0 0
  %1172 = vmatpush2.bf16.msra.mxu0 0
  %1173 = vmatprep.subr.bf16.mxu0 0
  %1174 = vmatpush2.bf16.msra.mxu0 0
  %1175 = vmatprep.subr.bf16.mxu0 0
  %1176 = vmatpush2.bf16.msra.mxu0 0
  %1177 = vmatprep.subr.bf16.mxu0 0
  %1178 = vmatpush2.bf16.msra.mxu0 0
  %1179 = vmatprep.subr.bf16.mxu0 0
  %1180 = vmatpush2.bf16.msra.mxu0 0
  %1181 = vmatprep.subr.bf16.mxu0 0
  %1182 = vmatpush2.bf16.msra.mxu0 0
  %1183 = vmatprep.mubr.bf16.mxu0 0
  %1184 = vmatmul.mubr.bf16.gmra.mxu0 %v1146
  %v1185 = vpop.f32.mrf.mxu0
  %v1186 = vadd.f32 %v80, %v1185
  %v1187 = vpop.f32.mrf.mxu0
  %v1188 = vpop.f32.mrf.mxu0
  %v1189 = vadd.f32 %v80, %v1188
  %v1190 = vpop.f32.mrf.mxu0
  %1191 = vmatprep.mubr.bf16.mxu0 0
  %1192 = vmatmul.mubr.bf16.gmra.mxu0 %v1149
  %v1193 = vpop.f32.mrf.mxu0
  %v1194 = vadd.f32 %v80, %v1193
  %v1195 = vpop.f32.mrf.mxu0
  %v1196 = vpop.f32.mrf.mxu0
  %v1197 = vadd.f32 %v80, %v1196
  %v1198 = vpop.f32.mrf.mxu0
  %1199 = vdwg.mxu0
  %v1200 = vrot.slane %v1186, 7
  %v1201 = vrot.slane %v1189, 7
  %v1202 = vrot.slane %v1194, 7
  %v1203 = vrot.slane %v1197, 7
  %v1204 = vsel %vm521, %v1202, %v1203
  %v1205 = vsel %vm521, %v1201, %v1202
  %v1206 = vsel %vm521, %v1200, %v1201
  %v1207 = vsel %vm521, %v1203, %v1200
  %v1208 = vsel %vm135, %v1207, 0.0
  %v1209 = vsel %vm136, %v1206, 0.0
  %v1210 = vsel %vm137, %v1205, 0.0
  %v1211 = vsel %vm138, %v1204, 0.0
  %v1212 = vrot.slane %v1186, 1
  %v1213 = vrot.slane %v1189, 1
  %v1214 = vrot.slane %v1194, 1
  %v1215 = vrot.slane %v1197, 1
  %v1216 = vsel %vm534, %v1214, %v1215
  %v1217 = vsel %vm534, %v1213, %v1214
  %v1218 = vsel %vm534, %v1212, %v1213
  %v1219 = vsel %vm534, %v1215, %v1212
  %v1220 = vsel %vm139, %v1218, 0.0
  %v1221 = vsel %vm140, %v1217, 0.0
  %v1222 = vsel %vm141, %v1216, 0.0
  %v1223 = vsel %vm142, %v1219, 0.0
  %1228 = vrot.lane.b32.xlu0 %v1186, 32
  %v1229 = vpop.permute.xlu0 %1228
  %1230 = vrot.lane.b32.xlu0 %v1189, 32
  %v1231 = vpop.permute.xlu0 %1230
  %1232 = vrot.lane.b32.xlu0 %v1194, 32
  %v1233 = vpop.permute.xlu0 %1232
  %1234 = vrot.lane.b32.xlu0 %v1197, 32
  %v1235 = vpop.permute.xlu0 %1234
  %1244 = vrot.lane.b32.xlu0 %v1220, 64
  %v1245 = vpop.permute.xlu0 %1244
  %1246 = vrot.lane.b32.xlu0 %v1221, 64
  %v1247 = vpop.permute.xlu0 %1246
  %1248 = vrot.lane.b32.xlu0 %v1222, 64
  %v1249 = vpop.permute.xlu0 %1248
  %1250 = vrot.lane.b32.xlu0 %v1223, 64
  %v1251 = vpop.permute.xlu0 %1250
  %v1256 = vsel %vm575, %v1208, %v1229
  %v1257 = vsel %vm575, %v1209, %v1231
  %v1258 = vsel %vm575, %v1210, %v1233
  %v1259 = vsel %vm575, %v1211, %v1235
  %v1260 = vsel %vm580, %v1256, %v1245
  %v1261 = vsel %vm580, %v1257, %v1247
  %v1262 = vsel %vm580, %v1258, %v1249
  %v1263 = vsel %vm580, %v1259, %v1251
  %v1264 = vpack.c.bf16 %v1261, %v1260
  %v1265 = vpack.c.bf16 %v1263, %v1262
  %v1267 = vsel %vm635, %v1264, 0
  %v1270 = vsel %vm635, %v1265, 0
  %1272 = vmatprep.subr.bf16.mxu0 0
  %1273 = vmatpush1.bf16.msra.mxu0 0
  %1274 = vmatprep.subr.bf16.mxu0 0
  %1275 = vmatpush1.bf16.msra.mxu0 0
  %1276 = vmatprep.subr.bf16.mxu0 0
  %1277 = vmatpush1.bf16.msra.mxu0 %v628
  %1278 = vmatprep.subr.bf16.mxu0 0
  %1279 = vmatpush1.bf16.msra.mxu0 %v627
  %1280 = vmatprep.subr.bf16.mxu0 0
  %1281 = vmatpush1.bf16.msra.mxu0 %v626
  %1282 = vmatprep.subr.bf16.mxu0 0
  %1283 = vmatpush1.bf16.msra.mxu0 %v625
  %1284 = vmatprep.subr.bf16.mxu0 0
  %1285 = vmatpush1.bf16.msra.mxu0 %v624
  %1286 = vmatprep.subr.bf16.mxu0 0
  %1287 = vmatpush1.bf16.msra.mxu0 %v623
  %1288 = vmatprep.subr.bf16.mxu0 0
  %1289 = vmatpush2.bf16.msra.mxu0 0
  %1290 = vmatprep.subr.bf16.mxu0 0
  %1291 = vmatpush2.bf16.msra.mxu0 0
  %1292 = vmatprep.subr.bf16.mxu0 0
  %1293 = vmatpush2.bf16.msra.mxu0 0
  %1294 = vmatprep.subr.bf16.mxu0 0
  %1295 = vmatpush2.bf16.msra.mxu0 0
  %1296 = vmatprep.subr.bf16.mxu0 0
  %1297 = vmatpush2.bf16.msra.mxu0 0
  %1298 = vmatprep.subr.bf16.mxu0 0
  %1299 = vmatpush2.bf16.msra.mxu0 0
  %1300 = vmatprep.subr.bf16.mxu0 0
  %1301 = vmatpush2.bf16.msra.mxu0 0
  %1302 = vmatprep.subr.bf16.mxu0 0
  %1303 = vmatpush2.bf16.msra.mxu0 0
  %1304 = vmatprep.mubr.bf16.mxu0 0
  %1305 = vmatmul.mubr.bf16.gmra.mxu0 %v1267
  %v1306 = vpop.f32.mrf.mxu0
  %v1307 = vadd.f32 %v56, %v1306
  %v1308 = vpop.f32.mrf.mxu0
  %v1309 = vpop.f32.mrf.mxu0
  %v1310 = vadd.f32 %v56, %v1309
  %v1311 = vpop.f32.mrf.mxu0
  %1312 = vmatprep.mubr.bf16.mxu0 0
  %1313 = vmatmul.mubr.bf16.gmra.mxu0 %v1270
  %v1314 = vpop.f32.mrf.mxu0
  %v1315 = vadd.f32 %v56, %v1314
  %v1316 = vpop.f32.mrf.mxu0
  %v1317 = vpop.f32.mrf.mxu0
  %v1318 = vadd.f32 %v56, %v1317
  %v1319 = vpop.f32.mrf.mxu0
  %1320 = vdwg.mxu0
  %v1321 = vmax.f32 %v1307, 0.0
  %v1322 = vmax.f32 %v1310, 0.0
  %v1323 = vmax.f32 %v1315, 0.0
  %v1324 = vmax.f32 %v1318, 0.0
  %v1325 = vrot.slane %v1321, 6
  %v1326 = vrot.slane %v1322, 6
  %v1327 = vrot.slane %v1323, 6
  %v1328 = vrot.slane %v1324, 6
  %v1329 = vsel %vm699, %v1327, %v1328
  %v1330 = vsel %vm699, %v1326, %v1327
  %v1331 = vsel %vm699, %v1325, %v1326
  %v1332 = vsel %vm699, %v1328, %v1325
  %v1333 = vsel %vm143, %v1332, 0.0
  %v1334 = vsel %vm144, %v1331, 0.0
  %v1335 = vsel %vm145, %v1330, 0.0
  %v1336 = vsel %vm146, %v1329, 0.0
  %v1337 = vrot.slane %v1321, 2
  %v1338 = vrot.slane %v1322, 2
  %v1339 = vrot.slane %v1323, 2
  %v1340 = vrot.slane %v1324, 2
  %v1341 = vsel %vm712, %v1339, %v1340
  %v1342 = vsel %vm712, %v1338, %v1339
  %v1343 = vsel %vm712, %v1337, %v1338
  %v1344 = vsel %vm712, %v1340, %v1337
  %v1345 = vsel %vm147, %v1343, 0.0
  %v1346 = vsel %vm148, %v1342, 0.0
  %v1347 = vsel %vm149, %v1341, 0.0
  %v1348 = vsel %vm150, %v1344, 0.0
  %1353 = vrot.lane.b32.xlu0 %v1321, 32
  %v1354 = vpop.permute.xlu0 %1353
  %1355 = vrot.lane.b32.xlu0 %v1322, 32
  %v1356 = vpop.permute.xlu0 %1355
  %1357 = vrot.lane.b32.xlu0 %v1323, 32
  %v1358 = vpop.permute.xlu0 %1357
  %1359 = vrot.lane.b32.xlu0 %v1324, 32
  %v1360 = vpop.permute.xlu0 %1359
  %1369 = vrot.lane.b32.xlu0 %v1345, 64
  %v1370 = vpop.permute.xlu0 %1369
  %1371 = vrot.lane.b32.xlu0 %v1346, 64
  %v1372 = vpop.permute.xlu0 %1371
  %1373 = vrot.lane.b32.xlu0 %v1347, 64
  %v1374 = vpop.permute.xlu0 %1373
  %1375 = vrot.lane.b32.xlu0 %v1348, 64
  %v1376 = vpop.permute.xlu0 %1375
  %v1381 = vsel %vm575, %v1333, %v1354
  %v1382 = vsel %vm575, %v1334, %v1356
  %v1383 = vsel %vm575, %v1335, %v1358
  %v1384 = vsel %vm575, %v1336, %v1360
  %v1385 = vsel %vm580, %v1381, %v1370
  %v1386 = vsel %vm580, %v1382, %v1372
  %v1387 = vsel %vm580, %v1383, %v1374
  %v1388 = vsel %vm580, %v1384, %v1376
  %v1389 = vpack.c.bf16 %v1386, %v1385
  %v1390 = vpack.c.bf16 %v1388, %v1387
  %v1392 = vsel %vm635, %v1389, 0
  %v1395 = vsel %vm635, %v1390, 0
  %1397 = vmatprep.subr.bf16.mxu0 0
  %1398 = vmatpush1.bf16.msra.mxu0 0
  %1399 = vmatprep.subr.bf16.mxu0 0
  %1400 = vmatpush1.bf16.msra.mxu0 0
  %1401 = vmatprep.subr.bf16.mxu0 0
  %1402 = vmatpush1.bf16.msra.mxu0 %v805
  %1403 = vmatprep.subr.bf16.mxu0 0
  %1404 = vmatpush1.bf16.msra.mxu0 %v804
  %1405 = vmatprep.subr.bf16.mxu0 0
  %1406 = vmatpush1.bf16.msra.mxu0 %v803
  %1407 = vmatprep.subr.bf16.mxu0 0
  %1408 = vmatpush1.bf16.msra.mxu0 %v802
  %1409 = vmatprep.subr.bf16.mxu0 0
  %1410 = vmatpush1.bf16.msra.mxu0 %v801
  %1411 = vmatprep.subr.bf16.mxu0 0
  %1412 = vmatpush1.bf16.msra.mxu0 %v800
  %1413 = vmatprep.subr.bf16.mxu0 0
  %1414 = vmatpush2.bf16.msra.mxu0 0
  %1415 = vmatprep.subr.bf16.mxu0 0
  %1416 = vmatpush2.bf16.msra.mxu0 0
  %1417 = vmatprep.subr.bf16.mxu0 0
  %1418 = vmatpush2.bf16.msra.mxu0 0
  %1419 = vmatprep.subr.bf16.mxu0 0
  %1420 = vmatpush2.bf16.msra.mxu0 0
  %1421 = vmatprep.subr.bf16.mxu0 0
  %1422 = vmatpush2.bf16.msra.mxu0 0
  %1423 = vmatprep.subr.bf16.mxu0 0
  %1424 = vmatpush2.bf16.msra.mxu0 0
  %1425 = vmatprep.subr.bf16.mxu0 0
  %1426 = vmatpush2.bf16.msra.mxu0 0
  %1427 = vmatprep.subr.bf16.mxu0 0
  %1428 = vmatpush2.bf16.msra.mxu0 0
  %1429 = vmatprep.mubr.bf16.mxu0 0
  %1430 = vmatmul.mubr.bf16.gmra.mxu0 %v1392
  %v1431 = vpop.f32.mrf.mxu0
  %v1432 = vadd.f32 %v64, %v1431
  %v1433 = vpop.f32.mrf.mxu0
  %v1434 = vpop.f32.mrf.mxu0
  %v1435 = vadd.f32 %v64, %v1434
  %v1436 = vpop.f32.mrf.mxu0
  %1437 = vmatprep.mubr.bf16.mxu0 0
  %1438 = vmatmul.mubr.bf16.gmra.mxu0 %v1395
  %v1439 = vpop.f32.mrf.mxu0
  %v1440 = vadd.f32 %v64, %v1439
  %v1441 = vpop.f32.mrf.mxu0
  %v1442 = vpop.f32.mrf.mxu0
  %v1443 = vadd.f32 %v64, %v1442
  %v1444 = vpop.f32.mrf.mxu0
  %1445 = vdwg.mxu0
  %v1446 = vrot.slane %v1432, 4
  %v1447 = vrot.slane %v1435, 4
  %v1448 = vrot.slane %v1440, 4
  %v1449 = vrot.slane %v1443, 4
  %v1450 = vsel %vm871, %v1448, %v1449
  %v1451 = vsel %vm871, %v1447, %v1448
  %v1452 = vsel %vm871, %v1446, %v1447
  %v1453 = vsel %vm871, %v1449, %v1446
  %v1454 = vsel %vm151, %v1453, 0.0
  %v1455 = vsel %vm152, %v1452, 0.0
  %v1456 = vsel %vm153, %v1451, 0.0
  %v1457 = vsel %vm154, %v1450, 0.0
  %v1458 = vsel %vm155, %v1452, 0.0
  %v1459 = vsel %vm156, %v1451, 0.0
  %v1460 = vsel %vm157, %v1450, 0.0
  %v1461 = vsel %vm158, %v1453, 0.0
  %1466 = vrot.lane.b32.xlu0 %v1432, 32
  %v1467 = vpop.permute.xlu0 %1466
  %1468 = vrot.lane.b32.xlu0 %v1435, 32
  %v1469 = vpop.permute.xlu0 %1468
  %1470 = vrot.lane.b32.xlu0 %v1440, 32
  %v1471 = vpop.permute.xlu0 %1470
  %1472 = vrot.lane.b32.xlu0 %v1443, 32
  %v1473 = vpop.permute.xlu0 %1472
  %1482 = vrot.lane.b32.xlu0 %v1458, 64
  %v1483 = vpop.permute.xlu0 %1482
  %1484 = vrot.lane.b32.xlu0 %v1459, 64
  %v1485 = vpop.permute.xlu0 %1484
  %1486 = vrot.lane.b32.xlu0 %v1460, 64
  %v1487 = vpop.permute.xlu0 %1486
  %1488 = vrot.lane.b32.xlu0 %v1461, 64
  %v1489 = vpop.permute.xlu0 %1488
  %v1494 = vsel %vm575, %v1454, %v1467
  %v1495 = vsel %vm575, %v1455, %v1469
  %v1496 = vsel %vm575, %v1456, %v1471
  %v1497 = vsel %vm575, %v1457, %v1473
  %v1498 = vsel %vm580, %v1494, %v1483
  %v1499 = vsel %vm580, %v1495, %v1485
  %v1500 = vsel %vm580, %v1496, %v1487
  %v1501 = vsel %vm580, %v1497, %v1489
  %v1502 = vpack.c.bf16 %v1499, %v1498
  %v1503 = vpack.c.bf16 %v1501, %v1500
  %v1505 = vsel %vm635, %v1502, 0
  %v1508 = vsel %vm635, %v1503, 0
  %1510 = vmatprep.subr.bf16.mxu0 0
  %1511 = vmatpush1.bf16.msra.mxu0 0
  %1512 = vmatprep.subr.bf16.mxu0 0
  %1513 = vmatpush1.bf16.msra.mxu0 0
  %1514 = vmatprep.subr.bf16.mxu0 0
  %1515 = vmatpush1.bf16.msra.mxu0 %v968
  %1516 = vmatprep.subr.bf16.mxu0 0
  %1517 = vmatpush1.bf16.msra.mxu0 %v967
  %1518 = vmatprep.subr.bf16.mxu0 0
  %1519 = vmatpush1.bf16.msra.mxu0 %v966
  %1520 = vmatprep.subr.bf16.mxu0 0
  %1521 = vmatpush1.bf16.msra.mxu0 %v965
  %1522 = vmatprep.subr.bf16.mxu0 0
  %1523 = vmatpush1.bf16.msra.mxu0 %v964
  %1524 = vmatprep.subr.bf16.mxu0 0
  %1525 = vmatpush1.bf16.msra.mxu0 %v963
  %1526 = vmatprep.subr.bf16.mxu0 0
  %1527 = vmatpush2.bf16.msra.mxu0 0
  %1528 = vmatprep.subr.bf16.mxu0 0
  %1529 = vmatpush2.bf16.msra.mxu0 0
  %1530 = vmatprep.subr.bf16.mxu0 0
  %1531 = vmatpush2.bf16.msra.mxu0 0
  %1532 = vmatprep.subr.bf16.mxu0 0
  %1533 = vmatpush2.bf16.msra.mxu0 0
  %1534 = vmatprep.subr.bf16.mxu0 0
  %1535 = vmatpush2.bf16.msra.mxu0 0
  %1536 = vmatprep.subr.bf16.mxu0 0
  %1537 = vmatpush2.bf16.msra.mxu0 0
  %1538 = vmatprep.subr.bf16.mxu0 0
  %1539 = vmatpush2.bf16.msra.mxu0 0
  %1540 = vmatprep.subr.bf16.mxu0 0
  %1541 = vmatpush2.bf16.msra.mxu0 0
  %1542 = vmatprep.mubr.bf16.mxu0 0
  %1543 = vmatmul.mubr.bf16.gmra.mxu0 %v1505
  %v1544 = vpop.f32.mrf.mxu0
  %v1545 = vadd.f32 %v72, %v1544
  %v1546 = vpop.f32.mrf.mxu0
  %v1547 = vpop.f32.mrf.mxu0
  %v1548 = vadd.f32 %v72, %v1547
  %v1549 = vpop.f32.mrf.mxu0
  %1550 = vmatprep.mubr.bf16.mxu0 0
  %1551 = vmatmul.mubr.bf16.gmra.mxu0 %v1508
  %v1552 = vpop.f32.mrf.mxu0
  %v1553 = vadd.f32 %v72, %v1552
  %v1554 = vpop.f32.mrf.mxu0
  %v1555 = vpop.f32.mrf.mxu0
  %v1556 = vadd.f32 %v72, %v1555
  %v1557 = vpop.f32.mrf.mxu0
  %1558 = vdwg.mxu0
  %v1559 = vrot.slane %v1545, 7
  %v1560 = vrot.slane %v1548, 7
  %v1561 = vrot.slane %v1553, 7
  %v1562 = vrot.slane %v1556, 7
  %v1563 = vsel %vm521, %v1561, %v1562
  %v1564 = vsel %vm521, %v1560, %v1561
  %v1565 = vsel %vm521, %v1559, %v1560
  %v1566 = vsel %vm521, %v1562, %v1559
  %v1567 = vsel %vm135, %v1566, 0.0
  %v1568 = vsel %vm136, %v1565, 0.0
  %v1569 = vsel %vm137, %v1564, 0.0
  %v1570 = vsel %vm138, %v1563, 0.0
  %v1571 = vrot.slane %v1545, 1
  %v1572 = vrot.slane %v1548, 1
  %v1573 = vrot.slane %v1553, 1
  %v1574 = vrot.slane %v1556, 1
  %v1575 = vsel %vm534, %v1573, %v1574
  %v1576 = vsel %vm534, %v1572, %v1573
  %v1577 = vsel %vm534, %v1571, %v1572
  %v1578 = vsel %vm534, %v1574, %v1571
  %v1579 = vsel %vm139, %v1577, 0.0
  %v1580 = vsel %vm140, %v1576, 0.0
  %v1581 = vsel %vm141, %v1575, 0.0
  %v1582 = vsel %vm142, %v1578, 0.0
  %1587 = vrot.lane.b32.xlu0 %v1545, 32
  %v1588 = vpop.permute.xlu0 %1587
  %1589 = vrot.lane.b32.xlu0 %v1548, 32
  %v1590 = vpop.permute.xlu0 %1589
  %1591 = vrot.lane.b32.xlu0 %v1553, 32
  %v1592 = vpop.permute.xlu0 %1591
  %1593 = vrot.lane.b32.xlu0 %v1556, 32
  %v1594 = vpop.permute.xlu0 %1593
  %1603 = vrot.lane.b32.xlu0 %v1579, 64
  %v1604 = vpop.permute.xlu0 %1603
  %1605 = vrot.lane.b32.xlu0 %v1580, 64
  %v1606 = vpop.permute.xlu0 %1605
  %1607 = vrot.lane.b32.xlu0 %v1581, 64
  %v1608 = vpop.permute.xlu0 %1607
  %1609 = vrot.lane.b32.xlu0 %v1582, 64
  %v1610 = vpop.permute.xlu0 %1609
  %v1615 = vsel %vm575, %v1567, %v1588
  %v1616 = vsel %vm575, %v1568, %v1590
  %v1617 = vsel %vm575, %v1569, %v1592
  %v1618 = vsel %vm575, %v1570, %v1594
  %v1619 = vsel %vm580, %v1615, %v1604
  %v1620 = vsel %vm580, %v1616, %v1606
  %v1621 = vsel %vm580, %v1617, %v1608
  %v1622 = vsel %vm580, %v1618, %v1610
  %v1623 = vpack.c.bf16 %v1620, %v1619
  %v1624 = vpack.c.bf16 %v1622, %v1621
  %v1626 = vsel %vm635, %v1623, 0
  %v1629 = vsel %vm635, %v1624, 0
  %1631 = vmatprep.subr.bf16.mxu0 0
  %1632 = vmatpush1.bf16.msra.mxu0 0
  %1633 = vmatprep.subr.bf16.mxu0 0
  %1634 = vmatpush1.bf16.msra.mxu0 0
  %1635 = vmatprep.subr.bf16.mxu0 0
  %1636 = vmatpush1.bf16.msra.mxu0 %v1138
  %1637 = vmatprep.subr.bf16.mxu0 0
  %1638 = vmatpush1.bf16.msra.mxu0 %v1137
  %1639 = vmatprep.subr.bf16.mxu0 0
  %1640 = vmatpush1.bf16.msra.mxu0 %v1136
  %1641 = vmatprep.subr.bf16.mxu0 0
  %1642 = vmatpush1.bf16.msra.mxu0 %v1135
  %1643 = vmatprep.subr.bf16.mxu0 0
  %1644 = vmatpush1.bf16.msra.mxu0 %v1134
  %1645 = vmatprep.subr.bf16.mxu0 0
  %1646 = vmatpush1.bf16.msra.mxu0 %v1133
  %1647 = vmatprep.subr.bf16.mxu0 0
  %1648 = vmatpush2.bf16.msra.mxu0 0
  %1649 = vmatprep.subr.bf16.mxu0 0
  %1650 = vmatpush2.bf16.msra.mxu0 0
  %1651 = vmatprep.subr.bf16.mxu0 0
  %1652 = vmatpush2.bf16.msra.mxu0 0
  %1653 = vmatprep.subr.bf16.mxu0 0
  %1654 = vmatpush2.bf16.msra.mxu0 0
  %1655 = vmatprep.subr.bf16.mxu0 0
  %1656 = vmatpush2.bf16.msra.mxu0 0
  %1657 = vmatprep.subr.bf16.mxu0 0
  %1658 = vmatpush2.bf16.msra.mxu0 0
  %1659 = vmatprep.subr.bf16.mxu0 0
  %1660 = vmatpush2.bf16.msra.mxu0 0
  %1661 = vmatprep.subr.bf16.mxu0 0
  %1662 = vmatpush2.bf16.msra.mxu0 0
  %1663 = vmatprep.mubr.bf16.mxu0 0
  %1664 = vmatmul.mubr.bf16.gmra.mxu0 %v1626
  %v1665 = vpop.f32.mrf.mxu0
  %v1666 = vadd.f32 %v80, %v1665
  %v1667 = vpop.f32.mrf.mxu0
  %v1668 = vpop.f32.mrf.mxu0
  %v1669 = vadd.f32 %v80, %v1668
  %v1670 = vpop.f32.mrf.mxu0
  %1671 = vmatprep.mubr.bf16.mxu0 0
  %1672 = vmatmul.mubr.bf16.gmra.mxu0 %v1629
  %v1673 = vpop.f32.mrf.mxu0
  %v1674 = vadd.f32 %v80, %v1673
  %v1675 = vpop.f32.mrf.mxu0
  %v1676 = vpop.f32.mrf.mxu0
  %v1677 = vadd.f32 %v80, %v1676
  %v1678 = vpop.f32.mrf.mxu0
  %1679 = vdwg.mxu0
  %v1680 = vrot.slane %v1666, 7
  %v1681 = vrot.slane %v1669, 7
  %v1682 = vrot.slane %v1674, 7
  %v1683 = vrot.slane %v1677, 7
  %v1684 = vsel %vm521, %v1682, %v1683
  %v1685 = vsel %vm521, %v1681, %v1682
  %v1686 = vsel %vm521, %v1680, %v1681
  %v1687 = vsel %vm521, %v1683, %v1680
  %v1688 = vsel %vm135, %v1687, 0.0
  %v1689 = vsel %vm136, %v1686, 0.0
  %v1690 = vsel %vm137, %v1685, 0.0
  %v1691 = vsel %vm138, %v1684, 0.0
  %v1692 = vrot.slane %v1666, 1
  %v1693 = vrot.slane %v1669, 1
  %v1694 = vrot.slane %v1674, 1
  %v1695 = vrot.slane %v1677, 1
  %v1696 = vsel %vm534, %v1694, %v1695
  %v1697 = vsel %vm534, %v1693, %v1694
  %v1698 = vsel %vm534, %v1692, %v1693
  %v1699 = vsel %vm534, %v1695, %v1692
  %v1700 = vsel %vm139, %v1698, 0.0
  %v1701 = vsel %vm140, %v1697, 0.0
  %v1702 = vsel %vm141, %v1696, 0.0
  %v1703 = vsel %vm142, %v1699, 0.0
  %1708 = vrot.lane.b32.xlu0 %v1666, 32
  %v1709 = vpop.permute.xlu0 %1708
  %1710 = vrot.lane.b32.xlu0 %v1669, 32
  %v1711 = vpop.permute.xlu0 %1710
  %1712 = vrot.lane.b32.xlu0 %v1674, 32
  %v1713 = vpop.permute.xlu0 %1712
  %1714 = vrot.lane.b32.xlu0 %v1677, 32
  %v1715 = vpop.permute.xlu0 %1714
  %1724 = vrot.lane.b32.xlu0 %v1700, 64
  %v1725 = vpop.permute.xlu0 %1724
  %1726 = vrot.lane.b32.xlu0 %v1701, 64
  %v1727 = vpop.permute.xlu0 %1726
  %1728 = vrot.lane.b32.xlu0 %v1702, 64
  %v1729 = vpop.permute.xlu0 %1728
  %1730 = vrot.lane.b32.xlu0 %v1703, 64
  %v1731 = vpop.permute.xlu0 %1730
  %v1736 = vsel %vm575, %v1688, %v1709
  %v1737 = vsel %vm575, %v1689, %v1711
  %v1738 = vsel %vm575, %v1690, %v1713
  %v1739 = vsel %vm575, %v1691, %v1715
  %v1740 = vsel %vm580, %v1736, %v1725
  %v1741 = vsel %vm580, %v1737, %v1727
  %v1742 = vsel %vm580, %v1738, %v1729
  %v1743 = vsel %vm580, %v1739, %v1731
  %v1744 = vpack.c.bf16 %v1741, %v1740
  %v1745 = vpack.c.bf16 %v1743, %v1742
  %v1747 = vsel %vm635, %v1744, 0
  %v1750 = vsel %vm635, %v1745, 0
  %1752 = vmatprep.subr.bf16.mxu0 0
  %1753 = vmatpush1.bf16.msra.mxu0 0
  %1754 = vmatprep.subr.bf16.mxu0 0
  %1755 = vmatpush1.bf16.msra.mxu0 0
  %1756 = vmatprep.subr.bf16.mxu0 0
  %1757 = vmatpush1.bf16.msra.mxu0 %v628
  %1758 = vmatprep.subr.bf16.mxu0 0
  %1759 = vmatpush1.bf16.msra.mxu0 %v627
  %1760 = vmatprep.subr.bf16.mxu0 0
  %1761 = vmatpush1.bf16.msra.mxu0 %v626
  %1762 = vmatprep.subr.bf16.mxu0 0
  %1763 = vmatpush1.bf16.msra.mxu0 %v625
  %1764 = vmatprep.subr.bf16.mxu0 0
  %1765 = vmatpush1.bf16.msra.mxu0 %v624
  %1766 = vmatprep.subr.bf16.mxu0 0
  %1767 = vmatpush1.bf16.msra.mxu0 %v623
  %1768 = vmatprep.subr.bf16.mxu0 0
  %1769 = vmatpush2.bf16.msra.mxu0 0
  %1770 = vmatprep.subr.bf16.mxu0 0
  %1771 = vmatpush2.bf16.msra.mxu0 0
  %1772 = vmatprep.subr.bf16.mxu0 0
  %1773 = vmatpush2.bf16.msra.mxu0 0
  %1774 = vmatprep.subr.bf16.mxu0 0
  %1775 = vmatpush2.bf16.msra.mxu0 0
  %1776 = vmatprep.subr.bf16.mxu0 0
  %1777 = vmatpush2.bf16.msra.mxu0 0
  %1778 = vmatprep.subr.bf16.mxu0 0
  %1779 = vmatpush2.bf16.msra.mxu0 0
  %1780 = vmatprep.subr.bf16.mxu0 0
  %1781 = vmatpush2.bf16.msra.mxu0 0
  %1782 = vmatprep.subr.bf16.mxu0 0
  %1783 = vmatpush2.bf16.msra.mxu0 0
  %1784 = vmatprep.mubr.bf16.mxu0 0
  %1785 = vmatmul.mubr.bf16.gmra.mxu0 %v1747
  %v1786 = vpop.f32.mrf.mxu0
  %v1787 = vadd.f32 %v56, %v1786
  %v1788 = vpop.f32.mrf.mxu0
  %v1789 = vpop.f32.mrf.mxu0
  %v1790 = vadd.f32 %v56, %v1789
  %v1791 = vpop.f32.mrf.mxu0
  %1792 = vmatprep.mubr.bf16.mxu0 0
  %1793 = vmatmul.mubr.bf16.gmra.mxu0 %v1750
  %v1794 = vpop.f32.mrf.mxu0
  %v1795 = vadd.f32 %v56, %v1794
  %v1796 = vpop.f32.mrf.mxu0
  %v1797 = vpop.f32.mrf.mxu0
  %v1798 = vadd.f32 %v56, %v1797
  %v1799 = vpop.f32.mrf.mxu0
  %1800 = vdwg.mxu0
  %v1801 = vmax.f32 %v1787, 0.0
  %v1802 = vmax.f32 %v1790, 0.0
  %v1803 = vmax.f32 %v1795, 0.0
  %v1804 = vmax.f32 %v1798, 0.0
  %v1805 = vrot.slane %v1801, 6
  %v1806 = vrot.slane %v1802, 6
  %v1807 = vrot.slane %v1803, 6
  %v1808 = vrot.slane %v1804, 6
  %v1809 = vsel %vm699, %v1807, %v1808
  %v1810 = vsel %vm699, %v1806, %v1807
  %v1811 = vsel %vm699, %v1805, %v1806
  %v1812 = vsel %vm699, %v1808, %v1805
  %v1813 = vsel %vm143, %v1812, 0.0
  %v1814 = vsel %vm144, %v1811, 0.0
  %v1815 = vsel %vm145, %v1810, 0.0
  %v1816 = vsel %vm146, %v1809, 0.0
  %v1817 = vrot.slane %v1801, 2
  %v1818 = vrot.slane %v1802, 2
  %v1819 = vrot.slane %v1803, 2
  %v1820 = vrot.slane %v1804, 2
  %v1821 = vsel %vm712, %v1819, %v1820
  %v1822 = vsel %vm712, %v1818, %v1819
  %v1823 = vsel %vm712, %v1817, %v1818
  %v1824 = vsel %vm712, %v1820, %v1817
  %v1825 = vsel %vm147, %v1823, 0.0
  %v1826 = vsel %vm148, %v1822, 0.0
  %v1827 = vsel %vm149, %v1821, 0.0
  %v1828 = vsel %vm150, %v1824, 0.0
  %1833 = vrot.lane.b32.xlu0 %v1801, 32
  %v1834 = vpop.permute.xlu0 %1833
  %1835 = vrot.lane.b32.xlu0 %v1802, 32
  %v1836 = vpop.permute.xlu0 %1835
  %1837 = vrot.lane.b32.xlu0 %v1803, 32
  %v1838 = vpop.permute.xlu0 %1837
  %1839 = vrot.lane.b32.xlu0 %v1804, 32
  %v1840 = vpop.permute.xlu0 %1839
  %1849 = vrot.lane.b32.xlu0 %v1825, 64
  %v1850 = vpop.permute.xlu0 %1849
  %1851 = vrot.lane.b32.xlu0 %v1826, 64
  %v1852 = vpop.permute.xlu0 %1851
  %1853 = vrot.lane.b32.xlu0 %v1827, 64
  %v1854 = vpop.permute.xlu0 %1853
  %1855 = vrot.lane.b32.xlu0 %v1828, 64
  %v1856 = vpop.permute.xlu0 %1855
  %v1861 = vsel %vm575, %v1813, %v1834
  %v1862 = vsel %vm575, %v1814, %v1836
  %v1863 = vsel %vm575, %v1815, %v1838
  %v1864 = vsel %vm575, %v1816, %v1840
  %v1865 = vsel %vm580, %v1861, %v1850
  %v1866 = vsel %vm580, %v1862, %v1852
  %v1867 = vsel %vm580, %v1863, %v1854
  %v1868 = vsel %vm580, %v1864, %v1856
  %v1869 = vpack.c.bf16 %v1866, %v1865
  %v1870 = vpack.c.bf16 %v1868, %v1867
  %v1872 = vsel %vm635, %v1869, 0
  %v1875 = vsel %vm635, %v1870, 0
  %1877 = vmatprep.subr.bf16.mxu0 0
  %1878 = vmatpush1.bf16.msra.mxu0 0
  %1879 = vmatprep.subr.bf16.mxu0 0
  %1880 = vmatpush1.bf16.msra.mxu0 0
  %1881 = vmatprep.subr.bf16.mxu0 0
  %1882 = vmatpush1.bf16.msra.mxu0 %v805
  %1883 = vmatprep.subr.bf16.mxu0 0
  %1884 = vmatpush1.bf16.msra.mxu0 %v804
  %1885 = vmatprep.subr.bf16.mxu0 0
  %1886 = vmatpush1.bf16.msra.mxu0 %v803
  %1887 = vmatprep.subr.bf16.mxu0 0
  %1888 = vmatpush1.bf16.msra.mxu0 %v802
  %1889 = vmatprep.subr.bf16.mxu0 0
  %1890 = vmatpush1.bf16.msra.mxu0 %v801
  %1891 = vmatprep.subr.bf16.mxu0 0
  %1892 = vmatpush1.bf16.msra.mxu0 %v800
  %1893 = vmatprep.subr.bf16.mxu0 0
  %1894 = vmatpush2.bf16.msra.mxu0 0
  %1895 = vmatprep.subr.bf16.mxu0 0
  %1896 = vmatpush2.bf16.msra.mxu0 0
  %1897 = vmatprep.subr.bf16.mxu0 0
  %1898 = vmatpush2.bf16.msra.mxu0 0
  %1899 = vmatprep.subr.bf16.mxu0 0
  %1900 = vmatpush2.bf16.msra.mxu0 0
  %1901 = vmatprep.subr.bf16.mxu0 0
  %1902 = vmatpush2.bf16.msra.mxu0 0
  %1903 = vmatprep.subr.bf16.mxu0 0
  %1904 = vmatpush2.bf16.msra.mxu0 0
  %1905 = vmatprep.subr.bf16.mxu0 0
  %1906 = vmatpush2.bf16.msra.mxu0 0
  %1907 = vmatprep.subr.bf16.mxu0 0
  %1908 = vmatpush2.bf16.msra.mxu0 0
  %1909 = vmatprep.mubr.bf16.mxu0 0
  %1910 = vmatmul.mubr.bf16.gmra.mxu0 %v1872
  %v1911 = vpop.f32.mrf.mxu0
  %v1912 = vadd.f32 %v64, %v1911
  %v1913 = vpop.f32.mrf.mxu0
  %v1914 = vpop.f32.mrf.mxu0
  %v1915 = vadd.f32 %v64, %v1914
  %v1916 = vpop.f32.mrf.mxu0
  %1917 = vmatprep.mubr.bf16.mxu0 0
  %1918 = vmatmul.mubr.bf16.gmra.mxu0 %v1875
  %v1919 = vpop.f32.mrf.mxu0
  %v1920 = vadd.f32 %v64, %v1919
  %v1921 = vpop.f32.mrf.mxu0
  %v1922 = vpop.f32.mrf.mxu0
  %v1923 = vadd.f32 %v64, %v1922
  %v1924 = vpop.f32.mrf.mxu0
  %1925 = vdwg.mxu0
  %v1926 = vrot.slane %v1912, 4
  %v1927 = vrot.slane %v1915, 4
  %v1928 = vrot.slane %v1920, 4
  %v1929 = vrot.slane %v1923, 4
  %v1930 = vsel %vm871, %v1928, %v1929
  %v1931 = vsel %vm871, %v1927, %v1928
  %v1932 = vsel %vm871, %v1926, %v1927
  %v1933 = vsel %vm871, %v1929, %v1926
  %v1934 = vsel %vm151, %v1933, 0.0
  %v1935 = vsel %vm152, %v1932, 0.0
  %v1936 = vsel %vm153, %v1931, 0.0
  %v1937 = vsel %vm154, %v1930, 0.0
  %v1938 = vsel %vm155, %v1932, 0.0
  %v1939 = vsel %vm156, %v1931, 0.0
  %v1940 = vsel %vm157, %v1930, 0.0
  %v1941 = vsel %vm158, %v1933, 0.0
  %1946 = vrot.lane.b32.xlu0 %v1912, 32
  %v1947 = vpop.permute.xlu0 %1946
  %1948 = vrot.lane.b32.xlu0 %v1915, 32
  %v1949 = vpop.permute.xlu0 %1948
  %1950 = vrot.lane.b32.xlu0 %v1920, 32
  %v1951 = vpop.permute.xlu0 %1950
  %1952 = vrot.lane.b32.xlu0 %v1923, 32
  %v1953 = vpop.permute.xlu0 %1952
  %1962 = vrot.lane.b32.xlu0 %v1938, 64
  %v1963 = vpop.permute.xlu0 %1962
  %1964 = vrot.lane.b32.xlu0 %v1939, 64
  %v1965 = vpop.permute.xlu0 %1964
  %1966 = vrot.lane.b32.xlu0 %v1940, 64
  %v1967 = vpop.permute.xlu0 %1966
  %1968 = vrot.lane.b32.xlu0 %v1941, 64
  %v1969 = vpop.permute.xlu0 %1968
  %v1974 = vsel %vm575, %v1934, %v1947
  %v1975 = vsel %vm575, %v1935, %v1949
  %v1976 = vsel %vm575, %v1936, %v1951
  %v1977 = vsel %vm575, %v1937, %v1953
  %v1978 = vsel %vm580, %v1974, %v1963
  %v1979 = vsel %vm580, %v1975, %v1965
  %v1980 = vsel %vm580, %v1976, %v1967
  %v1981 = vsel %vm580, %v1977, %v1969
  %v1982 = vpack.c.bf16 %v1979, %v1978
  %v1983 = vpack.c.bf16 %v1981, %v1980
  %v1985 = vsel %vm635, %v1982, 0
  %v1988 = vsel %vm635, %v1983, 0
  %1990 = vmatprep.subr.bf16.mxu0 0
  %1991 = vmatpush1.bf16.msra.mxu0 0
  %1992 = vmatprep.subr.bf16.mxu0 0
  %1993 = vmatpush1.bf16.msra.mxu0 0
  %1994 = vmatprep.subr.bf16.mxu0 0
  %1995 = vmatpush1.bf16.msra.mxu0 %v968
  %1996 = vmatprep.subr.bf16.mxu0 0
  %1997 = vmatpush1.bf16.msra.mxu0 %v967
  %1998 = vmatprep.subr.bf16.mxu0 0
  %1999 = vmatpush1.bf16.msra.mxu0 %v966
  %2000 = vmatprep.subr.bf16.mxu0 0
  %2001 = vmatpush1.bf16.msra.mxu0 %v965
  %2002 = vmatprep.subr.bf16.mxu0 0
  %2003 = vmatpush1.bf16.msra.mxu0 %v964
  %2004 = vmatprep.subr.bf16.mxu0 0
  %2005 = vmatpush1.bf16.msra.mxu0 %v963
  %2006 = vmatprep.subr.bf16.mxu0 0
  %2007 = vmatpush2.bf16.msra.mxu0 0
  %2008 = vmatprep.subr.bf16.mxu0 0
  %2009 = vmatpush2.bf16.msra.mxu0 0
  %2010 = vmatprep.subr.bf16.mxu0 0
  %2011 = vmatpush2.bf16.msra.mxu0 0
  %2012 = vmatprep.subr.bf16.mxu0 0
  %2013 = vmatpush2.bf16.msra.mxu0 0
  %2014 = vmatprep.subr.bf16.mxu0 0
  %2015 = vmatpush2.bf16.msra.mxu0 0
  %2016 = vmatprep.subr.bf16.mxu0 0
  %2017 = vmatpush2.bf16.msra.mxu0 0
  %2018 = vmatprep.subr.bf16.mxu0 0
  %2019 = vmatpush2.bf16.msra.mxu0 0
  %2020 = vmatprep.subr.bf16.mxu0 0
  %2021 = vmatpush2.bf16.msra.mxu0 0
  %2022 = vmatprep.mubr.bf16.mxu0 0
  %2023 = vmatmul.mubr.bf16.gmra.mxu0 %v1985
  %v2024 = vpop.f32.mrf.mxu0
  %v2025 = vadd.f32 %v72, %v2024
  %v2026 = vpop.f32.mrf.mxu0
  %v2027 = vpop.f32.mrf.mxu0
  %v2028 = vadd.f32 %v72, %v2027
  %v2029 = vpop.f32.mrf.mxu0
  %2030 = vmatprep.mubr.bf16.mxu0 0
  %2031 = vmatmul.mubr.bf16.gmra.mxu0 %v1988
  %v2032 = vpop.f32.mrf.mxu0
  %v2033 = vadd.f32 %v72, %v2032
  %v2034 = vpop.f32.mrf.mxu0
  %v2035 = vpop.f32.mrf.mxu0
  %v2036 = vadd.f32 %v72, %v2035
  %v2037 = vpop.f32.mrf.mxu0
  %2038 = vdwg.mxu0
  %v2039 = vrot.slane %v2025, 7
  %v2040 = vrot.slane %v2028, 7
  %v2041 = vrot.slane %v2033, 7
  %v2042 = vrot.slane %v2036, 7
  %v2043 = vsel %vm521, %v2041, %v2042
  %v2044 = vsel %vm521, %v2040, %v2041
  %v2045 = vsel %vm521, %v2039, %v2040
  %v2046 = vsel %vm521, %v2042, %v2039
  %v2047 = vsel %vm135, %v2046, 0.0
  %v2048 = vsel %vm136, %v2045, 0.0
  %v2049 = vsel %vm137, %v2044, 0.0
  %v2050 = vsel %vm138, %v2043, 0.0
  %v2051 = vrot.slane %v2025, 1
  %v2052 = vrot.slane %v2028, 1
  %v2053 = vrot.slane %v2033, 1
  %v2054 = vrot.slane %v2036, 1
  %v2055 = vsel %vm534, %v2053, %v2054
  %v2056 = vsel %vm534, %v2052, %v2053
  %v2057 = vsel %vm534, %v2051, %v2052
  %v2058 = vsel %vm534, %v2054, %v2051
  %v2059 = vsel %vm139, %v2057, 0.0
  %v2060 = vsel %vm140, %v2056, 0.0
  %v2061 = vsel %vm141, %v2055, 0.0
  %v2062 = vsel %vm142, %v2058, 0.0
  %2067 = vrot.lane.b32.xlu0 %v2025, 32
  %v2068 = vpop.permute.xlu0 %2067
  %2069 = vrot.lane.b32.xlu0 %v2028, 32
  %v2070 = vpop.permute.xlu0 %2069
  %2071 = vrot.lane.b32.xlu0 %v2033, 32
  %v2072 = vpop.permute.xlu0 %2071
  %2073 = vrot.lane.b32.xlu0 %v2036, 32
  %v2074 = vpop.permute.xlu0 %2073
  %2083 = vrot.lane.b32.xlu0 %v2059, 64
  %v2084 = vpop.permute.xlu0 %2083
  %2085 = vrot.lane.b32.xlu0 %v2060, 64
  %v2086 = vpop.permute.xlu0 %2085
  %2087 = vrot.lane.b32.xlu0 %v2061, 64
  %v2088 = vpop.permute.xlu0 %2087
  %2089 = vrot.lane.b32.xlu0 %v2062, 64
  %v2090 = vpop.permute.xlu0 %2089
  %v2095 = vsel %vm575, %v2047, %v2068
  %v2096 = vsel %vm575, %v2048, %v2070
  %v2097 = vsel %vm575, %v2049, %v2072
  %v2098 = vsel %vm575, %v2050, %v2074
  %v2099 = vsel %vm580, %v2095, %v2084
  %v2100 = vsel %vm580, %v2096, %v2086
  %v2101 = vsel %vm580, %v2097, %v2088
  %v2102 = vsel %vm580, %v2098, %v2090
  %v2103 = vpack.c.bf16 %v2100, %v2099
  %v2104 = vpack.c.bf16 %v2102, %v2101
  %v2106 = vsel %vm635, %v2103, 0
  %v2109 = vsel %vm635, %v2104, 0
  %2111 = vmatprep.subr.bf16.mxu0 0
  %2112 = vmatpush1.bf16.msra.mxu0 0
  %2113 = vmatprep.subr.bf16.mxu0 0
  %2114 = vmatpush1.bf16.msra.mxu0 0
  %2115 = vmatprep.subr.bf16.mxu0 0
  %2116 = vmatpush1.bf16.msra.mxu0 %v1138
  %2117 = vmatprep.subr.bf16.mxu0 0
  %2118 = vmatpush1.bf16.msra.mxu0 %v1137
  %2119 = vmatprep.subr.bf16.mxu0 0
  %2120 = vmatpush1.bf16.msra.mxu0 %v1136
  %2121 = vmatprep.subr.bf16.mxu0 0
  %2122 = vmatpush1.bf16.msra.mxu0 %v1135
  %2123 = vmatprep.subr.bf16.mxu0 0
  %2124 = vmatpush1.bf16.msra.mxu0 %v1134
  %2125 = vmatprep.subr.bf16.mxu0 0
  %2126 = vmatpush1.bf16.msra.mxu0 %v1133
  %2127 = vmatprep.subr.bf16.mxu0 0
  %2128 = vmatpush2.bf16.msra.mxu0 0
  %2129 = vmatprep.subr.bf16.mxu0 0
  %2130 = vmatpush2.bf16.msra.mxu0 0
  %2131 = vmatprep.subr.bf16.mxu0 0
  %2132 = vmatpush2.bf16.msra.mxu0 0
  %2133 = vmatprep.subr.bf16.mxu0 0
  %2134 = vmatpush2.bf16.msra.mxu0 0
  %2135 = vmatprep.subr.bf16.mxu0 0
  %2136 = vmatpush2.bf16.msra.mxu0 0
  %2137 = vmatprep.subr.bf16.mxu0 0
  %2138 = vmatpush2.bf16.msra.mxu0 0
  %2139 = vmatprep.subr.bf16.mxu0 0
  %2140 = vmatpush2.bf16.msra.mxu0 0
  %2141 = vmatprep.subr.bf16.mxu0 0
  %2142 = vmatpush2.bf16.msra.mxu0 0
  %2143 = vmatprep.mubr.bf16.mxu0 0
  %2144 = vmatmul.mubr.bf16.gmra.mxu0 %v2106
  %v2145 = vpop.f32.mrf.mxu0
  %v2146 = vadd.f32 %v80, %v2145
  %v2147 = vpop.f32.mrf.mxu0
  %v2148 = vpop.f32.mrf.mxu0
  %v2149 = vadd.f32 %v80, %v2148
  %v2150 = vpop.f32.mrf.mxu0
  %2151 = vmatprep.mubr.bf16.mxu0 0
  %2152 = vmatmul.mubr.bf16.gmra.mxu0 %v2109
  %v2153 = vpop.f32.mrf.mxu0
  %v2154 = vadd.f32 %v80, %v2153
  %v2155 = vpop.f32.mrf.mxu0
  %v2156 = vpop.f32.mrf.mxu0
  %v2157 = vadd.f32 %v80, %v2156
  %v2158 = vpop.f32.mrf.mxu0
  %2159 = vdwg.mxu0
  %v2160 = vld [vmem:[%s5] sm:$0xff]
  %v2161 = vld [vmem:[%s5 + $0x8] sm:$0xff]
  %v2162 = vld [vmem:[%s5 + $0x10] sm:$0xff]
  %v2163 = vld [vmem:[%s5 + $0x18] sm:$0xff]
  %v2164 = vld [vmem:[%s6] sm:$0x1]
  %v2166 = vlaneseq
  %v2167 = vshrl.u32 %v2166, 7
  %v2168 = vsub.s32 0, %v2167
  %v2169 = vrot.slane %v2164, %v2168
  %v2172 = vsel %vm575, %v2146, 0
  %v2175 = vsel %vm575, %v2149, 0
  %v2178 = vsel %vm575, %v2154, 0
  %v2181 = vsel %vm575, %v2157, 0
  %2183 = vmatprep.subr.mxu0 0.0
  %2184 = vmatpush1.msra.mxu0 0.0
  %2185 = vmatprep.subr.mxu0 0.0
  %2186 = vmatpush1.msra.mxu0 0.0
  %2187 = vmatprep.subr.mxu0 0.0
  %2188 = vmatpush1.msra.mxu0 0.0
  %2189 = vmatprep.subr.mxu0 0.0
  %2190 = vmatpush1.msra.mxu0 0.0
  %2191 = vmatprep.subr.mxu0 0.0
  %2192 = vmatpush1.msra.mxu0 0.0
  %2193 = vmatprep.subr.mxu0 0.0
  %2194 = vmatpush1.msra.mxu0 0.0
  %2195 = vmatprep.subr.mxu0 0.0
  %2196 = vmatpush1.msra.mxu0 0.0
  %2197 = vmatprep.subr.mxu0 0.0
  %2198 = vmatpush1.msra.mxu0 0.0
  %2199 = vmatprep.subr.mxu0 0.0
  %2200 = vmatpush1.msra.mxu0 0.0
  %2201 = vmatprep.subr.mxu0 0.0
  %2202 = vmatpush1.msra.mxu0 0.0
  %2203 = vmatprep.subr.mxu0 0.0
  %2204 = vmatpush1.msra.mxu0 0.0
  %2205 = vmatprep.subr.mxu0 0.0
  %2206 = vmatpush1.msra.mxu0 0.0
  %2207 = vmatprep.subr.mxu0 0.0
  %2208 = vmatpush1.msra.mxu0 %v2163
  %2209 = vmatprep.subr.mxu0 0.0
  %2210 = vmatpush1.msra.mxu0 %v2162
  %2211 = vmatprep.subr.mxu0 0.0
  %2212 = vmatpush1.msra.mxu0 %v2161
  %2213 = vmatprep.subr.mxu0 0.0
  %2214 = vmatpush1.msra.mxu0 %v2160
  %2215 = vmatprep.subr.mxu0 0.0
  %2216 = vmatpush2.msra.mxu0 0.0
  %2217 = vmatprep.subr.mxu0 0.0
  %2218 = vmatpush2.msra.mxu0 0.0
  %2219 = vmatprep.subr.mxu0 0.0
  %2220 = vmatpush2.msra.mxu0 0.0
  %2221 = vmatprep.subr.mxu0 0.0
  %2222 = vmatpush2.msra.mxu0 0.0
  %2223 = vmatprep.subr.mxu0 0.0
  %2224 = vmatpush2.msra.mxu0 0.0
  %2225 = vmatprep.subr.mxu0 0.0
  %2226 = vmatpush2.msra.mxu0 0.0
  %2227 = vmatprep.subr.mxu0 0.0
  %2228 = vmatpush2.msra.mxu0 0.0
  %2229 = vmatprep.subr.mxu0 0.0
  %2230 = vmatpush2.msra.mxu0 0.0
  %2231 = vmatprep.subr.mxu0 0.0
  %2232 = vmatpush2.msra.mxu0 0.0
  %2233 = vmatprep.subr.mxu0 0.0
  %2234 = vmatpush2.msra.mxu0 0.0
  %2235 = vmatprep.subr.mxu0 0.0
  %2236 = vmatpush2.msra.mxu0 0.0
  %2237 = vmatprep.subr.mxu0 0.0
  %2238 = vmatpush2.msra.mxu0 0.0
  %2239 = vmatprep.subr.mxu0 0.0
  %2240 = vmatpush2.msra.mxu0 0.0
  %2241 = vmatprep.subr.mxu0 0.0
  %2242 = vmatpush2.msra.mxu0 0.0
  %2243 = vmatprep.subr.mxu0 0.0
  %2244 = vmatpush2.msra.mxu0 0.0
  %2245 = vmatprep.subr.mxu0 0.0
  %2246 = vmatpush2.msra.mxu0 0.0
  %2247 = vmatprep.mubr.f32.mxu0 0.0
  %2248 = vmatmul.mubr.f32.gmra.mxu0 %v2172
  %v2249 = vpop.f32.mrf.mxu0
  %v2250 = vadd.f32 %v2169, %v2249
  %v2251 = vpop.f32.mrf.mxu0
  %2252 = vmatprep.mubr.f32.mxu0 0.0
  %2253 = vmatmul.mubr.f32.gmra.mxu0 %v2175
  %v2254 = vpop.f32.mrf.mxu0
  %v2255 = vadd.f32 %v2169, %v2254
  %v2256 = vpop.f32.mrf.mxu0
  %2257 = vmatprep.mubr.f32.mxu0 0.0
  %2258 = vmatmul.mubr.f32.gmra.mxu0 %v2178
  %v2259 = vpop.f32.mrf.mxu0
  %v2260 = vadd.f32 %v2169, %v2259
  %v2261 = vpop.f32.mrf.mxu0
  %2262 = vmatprep.mubr.f32.mxu0 0.0
  %2263 = vmatmul.mubr.f32.gmra.mxu0 %v2181
  %v2264 = vpop.f32.mrf.mxu0
  %v2265 = vadd.f32 %v2169, %v2264
  %v2266 = vpop.f32.mrf.mxu0
  %2267 = vdwg.mxu0
  %2268 = vst [vmem:[%s7] sm:$0xff] %v2250
  %2269 = vst [vmem:[%s7 + $0x8] sm:$0xff] %v2255
  %2270 = vst [vmem:[%s7 + $0x10] sm:$0xff] %v2260
  %2271 = vst [vmem:[%s7 + $0x18] sm:$0xff] %v2265
  // Predicated region
  $region30: #{idcnn_logits_pallas.1} parent=0 // pred_check
    _
  $region31: #{idcnn_logits_pallas.1} parent=0 // pred_check_branch
    %2273 = sbr.rel (0) target = $region33
  $region32: #{idcnn_logits_pallas.1} parent=0 // pred_region
    _
  $region33: #{idcnn_logits_pallas.1} parent=0 // pred_fallthru
    _
  // Predicated region
  $region34: #{idcnn_logits_pallas.1} parent=0 // pred_check
    _
  $region35: #{idcnn_logits_pallas.1} parent=0 // pred_check_branch
    %2275 = sbr.rel (0) target = $region37
  $region36: #{idcnn_logits_pallas.1} parent=0 // pred_region
    _
  $region37: #{idcnn_logits_pallas.1} parent=0 // pred_fallthru
    _

</llo_original>
